<compile_context>
chip_gen: v7x
topology: tpu7x:2x2x1
jax: 0.10.0
libtpu: 0.0.40
codegen_flags: <defaults>
</compile_context>

<pallas_src>
import functools

import numpy as np
import jax
import jax.numpy as jnp
from jax.experimental import pallas as pl
from jax.experimental.pallas import tpu as pltpu


# ----------------------------- Pallas kernel ------------------------------

def _carrier_decoder_kernel(*refs, chans, Wp, W, M):
    """Fully fused CarrierDecoder forward for one batch element.

    refs = (x_ref, mask_ref, w_ref_0..w_ref_{L-1}, o_ref, act_ref, patch_ref)
      x_ref    : (1, C0, flat_len) bf16  zero-padded input, flattened (H+3, Wp)
      mask_ref : (1, M) f32              1.0 on real columns (x < W), else 0.0
      w_ref_l  : (2*Cout_l, 9*Cin_l + 1) bf16  fused [conv; gate | bias] GEMM^T
      o_ref    : (1, Cout_last, M) f32   lane-dense spatial axis (M = H*Wp)
      act_ref  : (Cmid_max, flat_len) bf16 scratch for padded intermediates
      patch_ref: (9*C0 + 1, M) bf16      scratch for the transposed im2col
    """
    n_layers = len(chans) - 1
    x_ref, mask_ref = refs[0], refs[1]
    w_refs = refs[2:2 + n_layers]
    o_ref = refs[2 + n_layers]
    act_ref, patch_ref = refs[3 + n_layers:5 + n_layers]

    mask = mask_ref[...]                                  # (1, M) f32
    ones_row = jnp.ones((1, M), patch_ref.dtype)          # bias row (hoisted)

    # Zero the intermediate-activation scratch so its zero halo is valid for
    # every layer of every grid step (scratch persists across iterations).
    act_ref[...] = jnp.zeros_like(act_ref)

    for l in range(n_layers):
        cin, cout = chans[l], chans[l + 1]

        # Current layer input: padded activation, channels-first, flattened.
        if l == 0:
            act = x_ref[0]                                # (cin, flat_len)
        else:
            act = act_ref[0:cin, :]                       # (cin, flat_len)

        # Transposed im2col built directly in VMEM scratch: tap t = ky*3+kx
        # occupies rows [t*cin, (t+1)*cin); row 9*cin is all-ones (bias).
        for t in range(9):
            ky, kx = divmod(t, 3)
            off = ky * Wp + kx
            patch_ref[t * cin:(t + 1) * cin, :] = act[:, off:off + M]
        patch_ref[9 * cin:9 * cin + 1, :] = ones_row

        # One fused MXU GEMM per layer: [conv; gate] x [taps; ones], f32 acc.
        acc = jnp.dot(w_refs[l][...], patch_ref[0:9 * cin + 1, :],
                      preferred_element_type=jnp.float32)   # (2*cout, M)

        x1 = acc[:cout, :]                    # conv half (bias already folded)
        zg = acc[cout:, :]                    # gate pre-activation
        if l == n_layers - 1:
            gate = 1.0 / (1.0 + jnp.exp(-zg))               # exact (final layer)
        else:
            gate = pl.reciprocal(1.0 + jnp.exp(-zg), approx=True)  # EUP
        y = x1 * gate                                       # (cout, M) f32

        if l == n_layers - 1:
            o_ref[0] = y.astype(o_ref.dtype)
        else:
            # Re-pad in VMEM for the next layer: zero the junk columns (the
            # flat-slab taps wrap across rows there) and place the block at
            # flat offset Wp+1 == padded position (1, 1).  The halo stays 0.
            act_ref[0:cout, Wp + 1:Wp + 1 + M] = (y * mask).astype(act_ref.dtype)


# ------------------------------- glue (JAX) -------------------------------

def fuse_carrier_decoder_params(params):
    """Fold each GatedBlock's (conv, gate) ConvTranspose2d weights + biases into
    one bf16 GEMM^T weight of shape (2*Cout, 9*Cin + 1); the last column is the
    bias, matched by the all-ones row the kernel appends to the patch matrix.
    Call ONCE outside the jitted forward (weights are static)."""
    def deconv_to_gemm_t(wt):
        # ConvTranspose2d(k=3, s=1, p=1) == Conv2d(p=1) with spatially flipped
        # kernel and swapped (cin, cout); wt is (Cin, Cout, 3, 3).
        cin, cout = wt.shape[0], wt.shape[1]
        w_eff = jnp.transpose(wt[:, :, ::-1, ::-1], (2, 3, 0, 1))  # (3,3,Cin,Cout)
        return w_eff.reshape(9 * cin, cout).T                      # (Cout, 9*Cin)

    fused = []
    for p in params:
        wc = deconv_to_gemm_t(p["wt_conv"])
        wg = deconv_to_gemm_t(p["wt_gate"])
        w = jnp.concatenate([wc, wg], axis=0)                      # (2*Cout, 9*Cin)
        b = jnp.concatenate([p["b_conv"], p["b_gate"]], axis=0)[:, None]
        fused.append(jnp.concatenate([w, b], axis=1).astype(jnp.bfloat16))
    return fused


def _pick_padded_width(H, W):
    """Smallest Wp >= W+2 with H*Wp a multiple of 128 (lane-dense flat axis)."""
    for cand in range(W + 2, W + 2 + 128):
        if (H * cand) % 128 == 0:
            return cand
    return W + 2   # unreachable; minimal conv padding fallback


def carrier_decoder_forward(fused_ws, x_nchw):
    """Matches PyTorch CarrierDecoder.forward (block_type='normal'), NCHW."""
    B, C0, H, W = x_nchw.shape
    n_layers = len(fused_ws)
    chans = (C0,) + tuple(int(w.shape[0]) // 2 for w in fused_ws)
    for l, w in enumerate(fused_ws):
        assert w.shape == (2 * chans[l + 1], 9 * chans[l] + 1), (l, w.shape)

    Wp = _pick_padded_width(H, W)
    M = H * Wp                       # flat output length (junk cols x >= W)
    flat_len = (H + 3) * Wp          # pad: 1 top, 2 bottom, 1 left, Wp-1-W right

    xp = jnp.pad(x_nchw, ((0, 0), (0, 0), (1, 2), (1, Wp - 1 - W)))
    x_flat = xp.reshape(B, C0, flat_len).astype(jnp.bfloat16)
    mask = (jnp.arange(M, dtype=jnp.int32) % Wp < W).astype(jnp.float32)[None, :]

    c_mid_max = max(chans[1:-1]) if n_layers > 1 else 1
    kernel = functools.partial(_carrier_decoder_kernel,
                               chans=chans, Wp=Wp, W=W, M=M)

    out = pl.pallas_call(
        kernel,
        out_shape=jax.ShapeDtypeStruct((B, chans[-1], M), jnp.float32),
        grid=(B,),
        in_specs=[
            pl.BlockSpec((1, C0, flat_len), lambda b: (b, 0, 0)),
            pl.BlockSpec((1, M), lambda b: (0, 0)),
        ] + [pl.BlockSpec(tuple(w.shape), lambda b: (0, 0)) for w in fused_ws],
        out_specs=pl.BlockSpec((1, chans[-1], M), lambda b: (b, 0, 0)),
        scratch_shapes=[
            pltpu.VMEM((c_mid_max, flat_len), jnp.bfloat16),   # padded intermediates
            pltpu.VMEM((9 * chans[0] + 1, M), jnp.bfloat16),   # im2col + ones row
        ],
        compiler_params=pltpu.CompilerParams(
            dimension_semantics=("parallel",)),                # 2 TCs on v7x
    )(x_flat, mask, *fused_ws)

    # (B, 1, H*Wp) -> (B, 1, H, Wp) -> drop the junk columns per row.
    return out.reshape(B, chans[-1], H, Wp)[:, :, :, :W]


# ----------------------------- parameter init -----------------------------

def init_carrier_decoder_params(key, conv_dim, num_repeat=3):
    """Deterministic synthetic params matching CarrierDecoder.__init__ shapes."""
    dims = []
    c = conv_dim
    for _ in range(num_repeat - 1):
        dims.append((int(c), int(c // 2)))
        c = c // 2
    dims.append((int(c), 1))

    params = []
    for cin, cout in dims:
        key, k1, k2, k3, k4 = jax.random.split(key, 5)
        scale = 1.0 / np.sqrt(cin * 9)
        params.append(dict(
            wt_conv=jax.random.uniform(k1, (cin, cout, 3, 3), jnp.float32, -scale, scale),
            b_conv=jax.random.uniform(k2, (cout,), jnp.float32, -scale, scale),
            wt_gate=jax.random.uniform(k3, (cin, cout, 3, 3), jnp.float32, -scale, scale),
            b_gate=jax.random.uniform(k4, (cout,), jnp.float32, -scale, scale),
        ))
    return params


# ------------------------ pure-numpy reference ----------------------------

def _convT_ref(x, wt, b):
    """Naive ConvTranspose2d(k=3, s=1, p=1), NCHW, weight (Cin,Cout,3,3)."""
    B, Cin, H, W = x.shape
    Cout = wt.shape[1]
    xp = np.pad(x, ((0, 0), (0, 0), (1, 1), (1, 1)))
    out = np.zeros((B, Cout, H, W), np.float32)
    for ky in range(3):
        for kx in range(3):
            out += np.einsum('bchw,cd->bdhw',
                             xp[:, :, 2 - ky:2 - ky + H, 2 - kx:2 - kx + W],
                             wt[:, :, ky, kx])
    return out + b[None, :, None, None]


def _carrier_decoder_ref(params, x):
    h = np.asarray(x, np.float32)
    for p in params:
        x1 = _convT_ref(h, np.asarray(p["wt_conv"]), np.asarray(p["b_conv"]))
        g = _convT_ref(h, np.asarray(p["wt_gate"]), np.asarray(p["b_gate"]))
        x2 = 1.0 / (1.0 + np.exp(-g))
        h = x1 * x2
    return h


# --------------------------------- main -----------------------------------

if __name__ == "__main__":
    key = jax.random.PRNGKey(0)
    conv_dim = 8                # channels: 8 -> 4 -> 2 -> 1
    B, H, W = 2, 16, 16

    kx, kp = jax.random.split(key)
    x = jax.random.normal(kx, (B, conv_dim, H, W), jnp.float32)   # NCHW
    params = init_carrier_decoder_params(kp, conv_dim, num_repeat=3)

    # Static weight folding hoisted out of the jitted forward.
    fused_ws = fuse_carrier_decoder_params(params)

    fwd = jax.jit(carrier_decoder_forward)
    out = jax.block_until_ready(fwd(fused_ws, x))

    ref = _carrier_decoder_ref(params, np.asarray(x))
    assert out.shape == (B, 1, H, W), out.shape
    # bf16 MXU feed (+ approx-reciprocal sigmoid in hidden layers) -> loosened
    # tolerances; the final layer uses the exact sigmoid.
    np.testing.assert_allclose(np.asarray(out, np.float32), ref,
                               rtol=2e-2, atol=2e-2)

    print("KERNEL_OK")
</pallas_src>

<mosaic_0001>
module attributes {stable_mosaic.version = 11 : i64} {
  func.func @_carrier_decoder_kernel(%arg0: i32, %arg1: memref<1x8x456xbf16, #tpu.memory_space<vmem>>, %arg2: memref<1x384xf32, #tpu.memory_space<vmem>>, %arg3: memref<8x73xbf16, #tpu.memory_space<vmem>>, %arg4: memref<4x37xbf16, #tpu.memory_space<vmem>>, %arg5: memref<2x19xbf16, #tpu.memory_space<vmem>>, %arg6: memref<1x1x384xf32, #tpu.memory_space<vmem>>, %arg7: memref<4x456xbf16, #tpu.memory_space<vmem>>, %arg8: memref<73x384xbf16, #tpu.memory_space<vmem>>) attributes {dimension_semantics = [#tpu.dimension_semantics<parallel>], iteration_bounds = array<i64: 2>, scalar_prefetch = 0 : i64, scratch_operands = 2 : i64, tpu.core_type = #tpu.core_type<tc>, window_params = [{transform_indices = @transform_0, window_bounds = array<i64: 1, 8, 456>}, {pipeline_mode = #tpu.pipeline_mode<synchronous>, transform_indices = @transform_1, window_bounds = array<i64: 1, 384>}, {pipeline_mode = #tpu.pipeline_mode<synchronous>, transform_indices = @transform_2, window_bounds = array<i64: 8, 73>}, {pipeline_mode = #tpu.pipeline_mode<synchronous>, transform_indices = @transform_3, window_bounds = array<i64: 4, 37>}, {pipeline_mode = #tpu.pipeline_mode<synchronous>, transform_indices = @transform_4, window_bounds = array<i64: 2, 19>}, {transform_indices = @transform_5, window_bounds = array<i64: 1, 1, 384>}]} {
    %c0 = arith.constant 0 : index
    %c0_0 = arith.constant 0 : index
    %0 = vector.load %arg2[%c0, %c0_0] : memref<1x384xf32, #tpu.memory_space<vmem>>, vector<1x384xf32>
    %cst = arith.constant 1.000000e+00 : bf16
    %1 = vector.broadcast %cst : bf16 to vector<1x384xbf16>
    %cst_1 = arith.constant 0.000000e+00 : bf16
    %2 = vector.broadcast %cst_1 : bf16 to vector<4x456xbf16>
    %c0_2 = arith.constant 0 : index
    %c0_3 = arith.constant 0 : index
    %3 = vector.load %arg7[%c0_2, %c0_3] : memref<4x456xbf16, #tpu.memory_space<vmem>>, vector<4x456xbf16>
    tpu.vector_store %arg7[%c0_2, %c0_3], %2 {strides = array<i32>} : memref<4x456xbf16, #tpu.memory_space<vmem>>, vector<4x456xbf16>,
    %c0_4 = arith.constant 0 : index
    %c0_5 = arith.constant 0 : index
    %c0_6 = arith.constant 0 : index
    %4 = vector.load %arg1[%c0_4, %c0_5, %c0_6] : memref<1x8x456xbf16, #tpu.memory_space<vmem>>, vector<1x8x456xbf16>
    %5 = vector.shape_cast %4 : vector<1x8x456xbf16> to vector<8x456xbf16>
    %6 = vector.extract_strided_slice %5 {offsets = [0, 0], sizes = [8, 384], strides = [1, 1]} : vector<8x456xbf16> to vector<8x384xbf16>
    %c0_7 = arith.constant 0 : index
    %c0_8 = arith.constant 0 : index
    %7 = vector.load %arg8[%c0_7, %c0_8] : memref<73x384xbf16, #tpu.memory_space<vmem>>, vector<8x384xbf16>
    tpu.vector_store %arg8[%c0_7, %c0_8], %6 {strides = array<i32>} : memref<73x384xbf16, #tpu.memory_space<vmem>>, vector<8x384xbf16>,
    %8 = vector.extract_strided_slice %5 {offsets = [0, 1], sizes = [8, 384], strides = [1, 1]} : vector<8x456xbf16> to vector<8x384xbf16>
    %c8 = arith.constant 8 : index
    %c0_9 = arith.constant 0 : index
    %9 = vector.load %arg8[%c8, %c0_9] : memref<73x384xbf16, #tpu.memory_space<vmem>>, vector<8x384xbf16>
    tpu.vector_store %arg8[%c8, %c0_9], %8 {strides = array<i32>} : memref<73x384xbf16, #tpu.memory_space<vmem>>, vector<8x384xbf16>,
    %10 = vector.extract_strided_slice %5 {offsets = [0, 2], sizes = [8, 384], strides = [1, 1]} : vector<8x456xbf16> to vector<8x384xbf16>
    %c16 = arith.constant 16 : index
    %c0_10 = arith.constant 0 : index
    %11 = vector.load %arg8[%c16, %c0_10] : memref<73x384xbf16, #tpu.memory_space<vmem>>, vector<8x384xbf16>
    tpu.vector_store %arg8[%c16, %c0_10], %10 {strides = array<i32>} : memref<73x384xbf16, #tpu.memory_space<vmem>>, vector<8x384xbf16>,
    %12 = vector.extract_strided_slice %5 {offsets = [0, 24], sizes = [8, 384], strides = [1, 1]} : vector<8x456xbf16> to vector<8x384xbf16>
    %c24 = arith.constant 24 : index
    %c0_11 = arith.constant 0 : index
    %13 = vector.load %arg8[%c24, %c0_11] : memref<73x384xbf16, #tpu.memory_space<vmem>>, vector<8x384xbf16>
    tpu.vector_store %arg8[%c24, %c0_11], %12 {strides = array<i32>} : memref<73x384xbf16, #tpu.memory_space<vmem>>, vector<8x384xbf16>,
    %14 = vector.extract_strided_slice %5 {offsets = [0, 25], sizes = [8, 384], strides = [1, 1]} : vector<8x456xbf16> to vector<8x384xbf16>
    %c32 = arith.constant 32 : index
    %c0_12 = arith.constant 0 : index
    %15 = vector.load %arg8[%c32, %c0_12] : memref<73x384xbf16, #tpu.memory_space<vmem>>, vector<8x384xbf16>
    tpu.vector_store %arg8[%c32, %c0_12], %14 {strides = array<i32>} : memref<73x384xbf16, #tpu.memory_space<vmem>>, vector<8x384xbf16>,
    %16 = vector.extract_strided_slice %5 {offsets = [0, 26], sizes = [8, 384], strides = [1, 1]} : vector<8x456xbf16> to vector<8x384xbf16>
    %c40 = arith.constant 40 : index
    %c0_13 = arith.constant 0 : index
    %17 = vector.load %arg8[%c40, %c0_13] : memref<73x384xbf16, #tpu.memory_space<vmem>>, vector<8x384xbf16>
    tpu.vector_store %arg8[%c40, %c0_13], %16 {strides = array<i32>} : memref<73x384xbf16, #tpu.memory_space<vmem>>, vector<8x384xbf16>,
    %18 = vector.extract_strided_slice %5 {offsets = [0, 48], sizes = [8, 384], strides = [1, 1]} : vector<8x456xbf16> to vector<8x384xbf16>
    %c48 = arith.constant 48 : index
    %c0_14 = arith.constant 0 : index
    %19 = vector.load %arg8[%c48, %c0_14] : memref<73x384xbf16, #tpu.memory_space<vmem>>, vector<8x384xbf16>
    tpu.vector_store %arg8[%c48, %c0_14], %18 {strides = array<i32>} : memref<73x384xbf16, #tpu.memory_space<vmem>>, vector<8x384xbf16>,
    %20 = vector.extract_strided_slice %5 {offsets = [0, 49], sizes = [8, 384], strides = [1, 1]} : vector<8x456xbf16> to vector<8x384xbf16>
    %c56 = arith.constant 56 : index
    %c0_15 = arith.constant 0 : index
    %21 = vector.load %arg8[%c56, %c0_15] : memref<73x384xbf16, #tpu.memory_space<vmem>>, vector<8x384xbf16>
    tpu.vector_store %arg8[%c56, %c0_15], %20 {strides = array<i32>} : memref<73x384xbf16, #tpu.memory_space<vmem>>, vector<8x384xbf16>,
    %22 = vector.extract_strided_slice %5 {offsets = [0, 50], sizes = [8, 384], strides = [1, 1]} : vector<8x456xbf16> to vector<8x384xbf16>
    %c64 = arith.constant 64 : index
    %c0_16 = arith.constant 0 : index
    %23 = vector.load %arg8[%c64, %c0_16] : memref<73x384xbf16, #tpu.memory_space<vmem>>, vector<8x384xbf16>
    tpu.vector_store %arg8[%c64, %c0_16], %22 {strides = array<i32>} : memref<73x384xbf16, #tpu.memory_space<vmem>>, vector<8x384xbf16>,
    %c72 = arith.constant 72 : index
    %c0_17 = arith.constant 0 : index
    %24 = vector.load %arg8[%c72, %c0_17] : memref<73x384xbf16, #tpu.memory_space<vmem>>, vector<1x384xbf16>
    tpu.vector_store %arg8[%c72, %c0_17], %1 {strides = array<i32>} : memref<73x384xbf16, #tpu.memory_space<vmem>>, vector<1x384xbf16>,
    %c0_18 = arith.constant 0 : index
    %c0_19 = arith.constant 0 : index
    %25 = vector.load %arg3[%c0_18, %c0_19] : memref<8x73xbf16, #tpu.memory_space<vmem>>, vector<8x73xbf16>
    %c0_20 = arith.constant 0 : index
    %c0_21 = arith.constant 0 : index
    %26 = vector.load %arg8[%c0_20, %c0_21] : memref<73x384xbf16, #tpu.memory_space<vmem>>, vector<73x384xbf16>
    %cst_22 = arith.constant dense<0.000000e+00> : vector<8x384xf32>
    %27 = tpu.matmul %25, %26, %cst_22 {dimension_numbers = #tpu.dot_dimension_numbers<[1], [0], [0], [1], [0, 0, 1, 1], [], []>} : vector<8x73xbf16>, vector<73x384xbf16>, vector<8x384xf32> -> vector<8x384xf32>
    %28 = vector.extract_strided_slice %27 {offsets = [0, 0], sizes = [4, 384], strides = [1, 1]} : vector<8x384xf32> to vector<4x384xf32>
    %29 = vector.extract_strided_slice %27 {offsets = [4, 0], sizes = [4, 384], strides = [1, 1]} : vector<8x384xf32> to vector<4x384xf32>
    %cst_23 = arith.constant 0.000000e+00 : f32
    %30 = vector.broadcast %cst_23 : f32 to vector<4x384xf32>
    %31 = arith.subf %30, %29 : vector<4x384xf32>
    %32 = math.exp %31 : vector<4x384xf32>
    %cst_24 = arith.constant 1.000000e+00 : f32
    %33 = vector.broadcast %cst_24 : f32 to vector<4x384xf32>
    %34 = arith.addf %33, %32 : vector<4x384xf32>
    %35 = tpu.reciprocal %34 {approx = true} : vector<4x384xf32> -> vector<4x384xf32>
    %36 = arith.mulf %28, %35 : vector<4x384xf32>
    %37 = vector.broadcast %0 : vector<1x384xf32> to vector<4x384xf32>
    %38 = arith.mulf %36, %37 : vector<4x384xf32>
    %39 = arith.truncf %38 : vector<4x384xf32> to vector<4x384xbf16>
    %c0_25 = arith.constant 0 : index
    %c25 = arith.constant 25 : index
    %40 = vector.load %arg7[%c0_25, %c25] : memref<4x456xbf16, #tpu.memory_space<vmem>>, vector<4x384xbf16>
    tpu.vector_store %arg7[%c0_25, %c25], %39 {strides = array<i32>} : memref<4x456xbf16, #tpu.memory_space<vmem>>, vector<4x384xbf16>,
    %c0_26 = arith.constant 0 : index
    %c0_27 = arith.constant 0 : index
    %41 = vector.load %arg7[%c0_26, %c0_27] : memref<4x456xbf16, #tpu.memory_space<vmem>>, vector<4x456xbf16>
    %42 = vector.extract_strided_slice %41 {offsets = [0, 0], sizes = [4, 384], strides = [1, 1]} : vector<4x456xbf16> to vector<4x384xbf16>
    %c0_28 = arith.constant 0 : index
    %c0_29 = arith.constant 0 : index
    %43 = vector.load %arg8[%c0_28, %c0_29] : memref<73x384xbf16, #tpu.memory_space<vmem>>, vector<4x384xbf16>
    tpu.vector_store %arg8[%c0_28, %c0_29], %42 {strides = array<i32>} : memref<73x384xbf16, #tpu.memory_space<vmem>>, vector<4x384xbf16>,
    %44 = vector.extract_strided_slice %41 {offsets = [0, 1], sizes = [4, 384], strides = [1, 1]} : vector<4x456xbf16> to vector<4x384xbf16>
    %c4 = arith.constant 4 : index
    %c0_30 = arith.constant 0 : index
    %45 = vector.load %arg8[%c4, %c0_30] : memref<73x384xbf16, #tpu.memory_space<vmem>>, vector<4x384xbf16>
    tpu.vector_store %arg8[%c4, %c0_30], %44 {strides = array<i32>} : memref<73x384xbf16, #tpu.memory_space<vmem>>, vector<4x384xbf16>,
    %46 = vector.extract_strided_slice %41 {offsets = [0, 2], sizes = [4, 384], strides = [1, 1]} : vector<4x456xbf16> to vector<4x384xbf16>
    %c8_31 = arith.constant 8 : index
    %c0_32 = arith.constant 0 : index
    %47 = vector.load %arg8[%c8_31, %c0_32] : memref<73x384xbf16, #tpu.memory_space<vmem>>, vector<4x384xbf16>
    tpu.vector_store %arg8[%c8_31, %c0_32], %46 {strides = array<i32>} : memref<73x384xbf16, #tpu.memory_space<vmem>>, vector<4x384xbf16>,
    %48 = vector.extract_strided_slice %41 {offsets = [0, 24], sizes = [4, 384], strides = [1, 1]} : vector<4x456xbf16> to vector<4x384xbf16>
    %c12 = arith.constant 12 : index
    %c0_33 = arith.constant 0 : index
    %49 = vector.load %arg8[%c12, %c0_33] : memref<73x384xbf16, #tpu.memory_space<vmem>>, vector<4x384xbf16>
    tpu.vector_store %arg8[%c12, %c0_33], %48 {strides = array<i32>} : memref<73x384xbf16, #tpu.memory_space<vmem>>, vector<4x384xbf16>,
    %50 = vector.extract_strided_slice %41 {offsets = [0, 25], sizes = [4, 384], strides = [1, 1]} : vector<4x456xbf16> to vector<4x384xbf16>
    %c16_34 = arith.constant 16 : index
    %c0_35 = arith.constant 0 : index
    %51 = vector.load %arg8[%c16_34, %c0_35] : memref<73x384xbf16, #tpu.memory_space<vmem>>, vector<4x384xbf16>
    tpu.vector_store %arg8[%c16_34, %c0_35], %50 {strides = array<i32>} : memref<73x384xbf16, #tpu.memory_space<vmem>>, vector<4x384xbf16>,
    %52 = vector.extract_strided_slice %41 {offsets = [0, 26], sizes = [4, 384], strides = [1, 1]} : vector<4x456xbf16> to vector<4x384xbf16>
    %c20 = arith.constant 20 : index
    %c0_36 = arith.constant 0 : index
    %53 = vector.load %arg8[%c20, %c0_36] : memref<73x384xbf16, #tpu.memory_space<vmem>>, vector<4x384xbf16>
    tpu.vector_store %arg8[%c20, %c0_36], %52 {strides = array<i32>} : memref<73x384xbf16, #tpu.memory_space<vmem>>, vector<4x384xbf16>,
    %54 = vector.extract_strided_slice %41 {offsets = [0, 48], sizes = [4, 384], strides = [1, 1]} : vector<4x456xbf16> to vector<4x384xbf16>
    %c24_37 = arith.constant 24 : index
    %c0_38 = arith.constant 0 : index
    %55 = vector.load %arg8[%c24_37, %c0_38] : memref<73x384xbf16, #tpu.memory_space<vmem>>, vector<4x384xbf16>
    tpu.vector_store %arg8[%c24_37, %c0_38], %54 {strides = array<i32>} : memref<73x384xbf16, #tpu.memory_space<vmem>>, vector<4x384xbf16>,
    %56 = vector.extract_strided_slice %41 {offsets = [0, 49], sizes = [4, 384], strides = [1, 1]} : vector<4x456xbf16> to vector<4x384xbf16>
    %c28 = arith.constant 28 : index
    %c0_39 = arith.constant 0 : index
    %57 = vector.load %arg8[%c28, %c0_39] : memref<73x384xbf16, #tpu.memory_space<vmem>>, vector<4x384xbf16>
    tpu.vector_store %arg8[%c28, %c0_39], %56 {strides = array<i32>} : memref<73x384xbf16, #tpu.memory_space<vmem>>, vector<4x384xbf16>,
    %58 = vector.extract_strided_slice %41 {offsets = [0, 50], sizes = [4, 384], strides = [1, 1]} : vector<4x456xbf16> to vector<4x384xbf16>
    %c32_40 = arith.constant 32 : index
    %c0_41 = arith.constant 0 : index
    %59 = vector.load %arg8[%c32_40, %c0_41] : memref<73x384xbf16, #tpu.memory_space<vmem>>, vector<4x384xbf16>
    tpu.vector_store %arg8[%c32_40, %c0_41], %58 {strides = array<i32>} : memref<73x384xbf16, #tpu.memory_space<vmem>>, vector<4x384xbf16>,
    %c36 = arith.constant 36 : index
    %c0_42 = arith.constant 0 : index
    %60 = vector.load %arg8[%c36, %c0_42] : memref<73x384xbf16, #tpu.memory_space<vmem>>, vector<1x384xbf16>
    tpu.vector_store %arg8[%c36, %c0_42], %1 {strides = array<i32>} : memref<73x384xbf16, #tpu.memory_space<vmem>>, vector<1x384xbf16>,
    %c0_43 = arith.constant 0 : index
    %c0_44 = arith.constant 0 : index
    %61 = vector.load %arg4[%c0_43, %c0_44] : memref<4x37xbf16, #tpu.memory_space<vmem>>, vector<4x37xbf16>
    %c0_45 = arith.constant 0 : index
    %c0_46 = arith.constant 0 : index
    %62 = vector.load %arg8[%c0_45, %c0_46] : memref<73x384xbf16, #tpu.memory_space<vmem>>, vector<37x384xbf16>
    %cst_47 = arith.constant dense<0.000000e+00> : vector<4x384xf32>
    %63 = tpu.matmul %61, %62, %cst_47 {dimension_numbers = #tpu.dot_dimension_numbers<[1], [0], [0], [1], [0, 0, 1, 1], [], []>} : vector<4x37xbf16>, vector<37x384xbf16>, vector<4x384xf32> -> vector<4x384xf32>
    %64 = vector.extract_strided_slice %63 {offsets = [0, 0], sizes = [2, 384], strides = [1, 1]} : vector<4x384xf32> to vector<2x384xf32>
    %65 = vector.extract_strided_slice %63 {offsets = [2, 0], sizes = [2, 384], strides = [1, 1]} : vector<4x384xf32> to vector<2x384xf32>
    %cst_48 = arith.constant 0.000000e+00 : f32
    %66 = vector.broadcast %cst_48 : f32 to vector<2x384xf32>
    %67 = arith.subf %66, %65 : vector<2x384xf32>
    %68 = math.exp %67 : vector<2x384xf32>
    %cst_49 = arith.constant 1.000000e+00 : f32
    %69 = vector.broadcast %cst_49 : f32 to vector<2x384xf32>
    %70 = arith.addf %69, %68 : vector<2x384xf32>
    %71 = tpu.reciprocal %70 {approx = true} : vector<2x384xf32> -> vector<2x384xf32>
    %72 = arith.mulf %64, %71 : vector<2x384xf32>
    %73 = vector.broadcast %0 : vector<1x384xf32> to vector<2x384xf32>
    %74 = arith.mulf %72, %73 : vector<2x384xf32>
    %75 = arith.truncf %74 : vector<2x384xf32> to vector<2x384xbf16>
    %c0_50 = arith.constant 0 : index
    %c25_51 = arith.constant 25 : index
    %76 = vector.load %arg7[%c0_50, %c25_51] : memref<4x456xbf16, #tpu.memory_space<vmem>>, vector<2x384xbf16>
    tpu.vector_store %arg7[%c0_50, %c25_51], %75 {strides = array<i32>} : memref<4x456xbf16, #tpu.memory_space<vmem>>, vector<2x384xbf16>,
    %c0_52 = arith.constant 0 : index
    %c0_53 = arith.constant 0 : index
    %77 = vector.load %arg7[%c0_52, %c0_53] : memref<4x456xbf16, #tpu.memory_space<vmem>>, vector<2x456xbf16>
    %78 = vector.extract_strided_slice %77 {offsets = [0, 0], sizes = [2, 384], strides = [1, 1]} : vector<2x456xbf16> to vector<2x384xbf16>
    %c0_54 = arith.constant 0 : index
    %c0_55 = arith.constant 0 : index
    %79 = vector.load %arg8[%c0_54, %c0_55] : memref<73x384xbf16, #tpu.memory_space<vmem>>, vector<2x384xbf16>
    tpu.vector_store %arg8[%c0_54, %c0_55], %78 {strides = array<i32>} : memref<73x384xbf16, #tpu.memory_space<vmem>>, vector<2x384xbf16>,
    %80 = vector.extract_strided_slice %77 {offsets = [0, 1], sizes = [2, 384], strides = [1, 1]} : vector<2x456xbf16> to vector<2x384xbf16>
    %c2 = arith.constant 2 : index
    %c0_56 = arith.constant 0 : index
    %81 = vector.load %arg8[%c2, %c0_56] : memref<73x384xbf16, #tpu.memory_space<vmem>>, vector<2x384xbf16>
    tpu.vector_store %arg8[%c2, %c0_56], %80 {strides = array<i32>} : memref<73x384xbf16, #tpu.memory_space<vmem>>, vector<2x384xbf16>,
    %82 = vector.extract_strided_slice %77 {offsets = [0, 2], sizes = [2, 384], strides = [1, 1]} : vector<2x456xbf16> to vector<2x384xbf16>
    %c4_57 = arith.constant 4 : index
    %c0_58 = arith.constant 0 : index
    %83 = vector.load %arg8[%c4_57, %c0_58] : memref<73x384xbf16, #tpu.memory_space<vmem>>, vector<2x384xbf16>
    tpu.vector_store %arg8[%c4_57, %c0_58], %82 {strides = array<i32>} : memref<73x384xbf16, #tpu.memory_space<vmem>>, vector<2x384xbf16>,
    %84 = vector.extract_strided_slice %77 {offsets = [0, 24], sizes = [2, 384], strides = [1, 1]} : vector<2x456xbf16> to vector<2x384xbf16>
    %c6 = arith.constant 6 : index
    %c0_59 = arith.constant 0 : index
    %85 = vector.load %arg8[%c6, %c0_59] : memref<73x384xbf16, #tpu.memory_space<vmem>>, vector<2x384xbf16>
    tpu.vector_store %arg8[%c6, %c0_59], %84 {strides = array<i32>} : memref<73x384xbf16, #tpu.memory_space<vmem>>, vector<2x384xbf16>,
    %86 = vector.extract_strided_slice %77 {offsets = [0, 25], sizes = [2, 384], strides = [1, 1]} : vector<2x456xbf16> to vector<2x384xbf16>
    %c8_60 = arith.constant 8 : index
    %c0_61 = arith.constant 0 : index
    %87 = vector.load %arg8[%c8_60, %c0_61] : memref<73x384xbf16, #tpu.memory_space<vmem>>, vector<2x384xbf16>
    tpu.vector_store %arg8[%c8_60, %c0_61], %86 {strides = array<i32>} : memref<73x384xbf16, #tpu.memory_space<vmem>>, vector<2x384xbf16>,
    %88 = vector.extract_strided_slice %77 {offsets = [0, 26], sizes = [2, 384], strides = [1, 1]} : vector<2x456xbf16> to vector<2x384xbf16>
    %c10 = arith.constant 10 : index
    %c0_62 = arith.constant 0 : index
    %89 = vector.load %arg8[%c10, %c0_62] : memref<73x384xbf16, #tpu.memory_space<vmem>>, vector<2x384xbf16>
    tpu.vector_store %arg8[%c10, %c0_62], %88 {strides = array<i32>} : memref<73x384xbf16, #tpu.memory_space<vmem>>, vector<2x384xbf16>,
    %90 = vector.extract_strided_slice %77 {offsets = [0, 48], sizes = [2, 384], strides = [1, 1]} : vector<2x456xbf16> to vector<2x384xbf16>
    %c12_63 = arith.constant 12 : index
    %c0_64 = arith.constant 0 : index
    %91 = vector.load %arg8[%c12_63, %c0_64] : memref<73x384xbf16, #tpu.memory_space<vmem>>, vector<2x384xbf16>
    tpu.vector_store %arg8[%c12_63, %c0_64], %90 {strides = array<i32>} : memref<73x384xbf16, #tpu.memory_space<vmem>>, vector<2x384xbf16>,
    %92 = vector.extract_strided_slice %77 {offsets = [0, 49], sizes = [2, 384], strides = [1, 1]} : vector<2x456xbf16> to vector<2x384xbf16>
    %c14 = arith.constant 14 : index
    %c0_65 = arith.constant 0 : index
    %93 = vector.load %arg8[%c14, %c0_65] : memref<73x384xbf16, #tpu.memory_space<vmem>>, vector<2x384xbf16>
    tpu.vector_store %arg8[%c14, %c0_65], %92 {strides = array<i32>} : memref<73x384xbf16, #tpu.memory_space<vmem>>, vector<2x384xbf16>,
    %94 = vector.extract_strided_slice %77 {offsets = [0, 50], sizes = [2, 384], strides = [1, 1]} : vector<2x456xbf16> to vector<2x384xbf16>
    %c16_66 = arith.constant 16 : index
    %c0_67 = arith.constant 0 : index
    %95 = vector.load %arg8[%c16_66, %c0_67] : memref<73x384xbf16, #tpu.memory_space<vmem>>, vector<2x384xbf16>
    tpu.vector_store %arg8[%c16_66, %c0_67], %94 {strides = array<i32>} : memref<73x384xbf16, #tpu.memory_space<vmem>>, vector<2x384xbf16>,
    %c18 = arith.constant 18 : index
    %c0_68 = arith.constant 0 : index
    %96 = vector.load %arg8[%c18, %c0_68] : memref<73x384xbf16, #tpu.memory_space<vmem>>, vector<1x384xbf16>
    tpu.vector_store %arg8[%c18, %c0_68], %1 {strides = array<i32>} : memref<73x384xbf16, #tpu.memory_space<vmem>>, vector<1x384xbf16>,
    %c0_69 = arith.constant 0 : index
    %c0_70 = arith.constant 0 : index
    %97 = vector.load %arg5[%c0_69, %c0_70] : memref<2x19xbf16, #tpu.memory_space<vmem>>, vector<2x19xbf16>
    %c0_71 = arith.constant 0 : index
    %c0_72 = arith.constant 0 : index
    %98 = vector.load %arg8[%c0_71, %c0_72] : memref<73x384xbf16, #tpu.memory_space<vmem>>, vector<19x384xbf16>
    %cst_73 = arith.constant dense<0.000000e+00> : vector<2x384xf32>
    %99 = tpu.matmul %97, %98, %cst_73 {dimension_numbers = #tpu.dot_dimension_numbers<[1], [0], [0], [1], [0, 0, 1, 1], [], []>} : vector<2x19xbf16>, vector<19x384xbf16>, vector<2x384xf32> -> vector<2x384xf32>
    %100 = vector.extract_strided_slice %99 {offsets = [0, 0], sizes = [1, 384], strides = [1, 1]} : vector<2x384xf32> to vector<1x384xf32>
    %101 = vector.extract_strided_slice %99 {offsets = [1, 0], sizes = [1, 384], strides = [1, 1]} : vector<2x384xf32> to vector<1x384xf32>
    %cst_74 = arith.constant 0.000000e+00 : f32
    %102 = vector.broadcast %cst_74 : f32 to vector<1x384xf32>
    %103 = arith.subf %102, %101 : vector<1x384xf32>
    %104 = math.exp %103 : vector<1x384xf32>
    %cst_75 = arith.constant 1.000000e+00 : f32
    %105 = vector.broadcast %cst_75 : f32 to vector<1x384xf32>
    %106 = arith.addf %105, %104 : vector<1x384xf32>
    %cst_76 = arith.constant 1.000000e+00 : f32
    %107 = vector.broadcast %cst_76 : f32 to vector<1x384xf32>
    %108 = arith.divf %107, %106 : vector<1x384xf32>
    %109 = arith.mulf %100, %108 : vector<1x384xf32>
    %c0_77 = arith.constant 0 : index
    %c0_78 = arith.constant 0 : index
    %c0_79 = arith.constant 0 : index
    %110 = vector.load %arg6[%c0_77, %c0_78, %c0_79] : memref<1x1x384xf32, #tpu.memory_space<vmem>>, vector<1x1x384xf32>
    %111 = vector.shape_cast %110 : vector<1x1x384xf32> to vector<1x384xf32>
    %112 = vector.shape_cast %109 : vector<1x384xf32> to vector<1x1x384xf32>
    tpu.vector_store %arg6[%c0_77, %c0_78, %c0_79], %112 {strides = array<i32>} : memref<1x1x384xf32, #tpu.memory_space<vmem>>, vector<1x1x384xf32>,
    return
  }
  func.func @transform_0(%arg0: i32) -> (i32, i32, i32) {
    %c0_i32 = arith.constant 0 : i32
    %c0_i32_0 = arith.constant 0 : i32
    %c0_i32_1 = arith.constant 0 : i32
    return %arg0, %c0_i32, %c0_i32_0 : i32, i32, i32
  }
  func.func @transform_1(%arg0: i32) -> (i32, i32) {
    %c0_i32 = arith.constant 0 : i32
    %c0_i32_0 = arith.constant 0 : i32
    %c0_i32_1 = arith.constant 0 : i32
    return %c0_i32, %c0_i32_0 : i32, i32
  }
  func.func @transform_2(%arg0: i32) -> (i32, i32) {
    %c0_i32 = arith.constant 0 : i32
    %c0_i32_0 = arith.constant 0 : i32
    %c0_i32_1 = arith.constant 0 : i32
    return %c0_i32, %c0_i32_0 : i32, i32
  }
  func.func @transform_3(%arg0: i32) -> (i32, i32) {
    %c0_i32 = arith.constant 0 : i32
    %c0_i32_0 = arith.constant 0 : i32
    %c0_i32_1 = arith.constant 0 : i32
    return %c0_i32, %c0_i32_0 : i32, i32
  }
  func.func @transform_4(%arg0: i32) -> (i32, i32) {
    %c0_i32 = arith.constant 0 : i32
    %c0_i32_0 = arith.constant 0 : i32
    %c0_i32_1 = arith.constant 0 : i32
    return %c0_i32, %c0_i32_0 : i32, i32
  }
  func.func @transform_5(%arg0: i32) -> (i32, i32, i32) {
    %c0_i32 = arith.constant 0 : i32
    %c0_i32_0 = arith.constant 0 : i32
    %c0_i32_1 = arith.constant 0 : i32
    return %arg0, %c0_i32, %c0_i32_0 : i32, i32, i32
  }
}

</mosaic_0001>

<llo_original>
// kernel: carrier_decoder_forward.1
$region0: #{carrier_decoder_forward.1}
  #allocation0 [shape = 'u32[]', space=smem, size = 0x4, offset = 0x4, fixed_abs, tag = 'smem constant byte address 0x4 - core index']
  #allocation1 [shape = 'u32[144,128]{1,0:T(1,128)}', space=vmem, size = 0x12000, scoped, tag = 'internal scratch']
  #allocation2 [shape = 'bf16[4,456]{1,0:T(4,128)(2,1)}', space=vmem, size = 0x1000, scoped, tag = 'scratch operand']
  #allocation3 [shape = 'bf16[73,384]{1,0:T(8,128)(2,1)}', space=vmem, size = 0xf000, scoped, tag = 'scratch operand']
  %s0 = inlined_call_operand.vmem [shape: bf16[2,8,456], index: 0, kind: input, shape index: {}]
  %s1 = inlined_call_operand.vmem [shape: f32[1,384], index: 1, kind: input, shape index: {}]
  %s2 = inlined_call_operand.vmem [shape: bf16[8,73], index: 2, kind: input, shape index: {}]
  %s3 = inlined_call_operand.vmem [shape: bf16[4,37], index: 3, kind: input, shape index: {}]
  %s4 = inlined_call_operand.vmem [shape: bf16[2,19], index: 4, kind: input, shape index: {}]
  %s5 = inlined_call_operand.vmem [shape: f32[2,1,384], index: 5, kind: output, shape index: {}]
  %s6 = sld [smem:[#allocation0]]
  $region53: #{carrier_decoder_forward.1} parent=0
    _
  %s8 = ssub.s32 1, %s6
  %s9 = scalar_select 0, %s8, %s6
  loop: start=0, step=1, limit=4
  $region2: #{carrier_decoder_forward.1} parent=0 // loop_pre_header
    _
  $region3: #{carrier_decoder_forward.1} parent=0 // loop_header
    %s11 = sphi 0, %s15
    %p12 = scmp.ge.s32.totalorder %s11, 4
    %s21 = sphi 0, %s23
    %s24 = sphi 0, %s21
    %s25 = sphi 0, %s24
    %s41 = sphi 0, %s25
    %s45 = sphi 0, %s45
    %s47 = sphi 0, %s45
    %s48 = sphi 0, %s47
    %s62 = sphi 0, %s48
    %s66 = sphi 0, %s66
    %s68 = sphi 0, %s66
    %s69 = sphi 0, %s68
    %s83 = sphi 0, %s69
    %s87 = sphi 0, %s87
    %s89 = sphi 0, %s87
    %s90 = sphi 0, %s89
    %s104 = sphi 0, %s90
    %s108 = sphi 0, %s108
    %s110 = sphi 0, %s108
    %s111 = sphi 0, %s110
    %s125 = sphi 0, %s111
    %s131 = sphi 0, %s133
    %s134 = sphi 0, %s131
    %s135 = sphi 0, %s134
    %s151 = sphi 0, %s135
  $region4: #{carrier_decoder_forward.1} parent=0 // loop_header_branch
    %14 = sbr.rel (%p12) target = $region8
  $region5: #{carrier_decoder_forward.1} parent=0 // loop_body
    %s16 = ssub.s32 %s11, 1
    %s17 = ssub.s32 %s11, 2
    %s18 = sadd.s32 %s11, 1
    %s19 = ssub.s32 %s11, %s18
    %p20 = scmp.eq.s32.totalorder %s19, 0
    %s22 = sadd.s32 %s21, 1
    %s23 = scalar_select %p20, %s21, %s22
    %p26 = pneg %p20
    %p27 = scmp.eq.s32.totalorder %s11, 1
    %p28 = por %p26, %p27
    %p29 = scmp.ne.s32.totalorder %s21, %s24
    %p30 = scmp.eq.s32.totalorder %s11, 0
    %p31 = por %p29, %p30
    %p32 = scmp.ne.s32.totalorder %s21, %s24
    %p33 = scmp.eq.s32.totalorder %s16, 1
    %p34 = por %p32, %p33
    %p35 = scmp.ne.s32.totalorder %s24, %s25
    %p36 = scmp.eq.s32.totalorder %s16, 0
    %p37 = por %p35, %p36
    %p38 = scmp.ne.s32.totalorder %s24, %s25
    %p39 = scmp.eq.s32.totalorder %s17, 1
    %p40 = por %p38, %p39
    %p42 = scmp.ne.s32.totalorder %s25, %s41
    %p43 = scmp.eq.s32.totalorder %s17, 0
    %p44 = por %p42, %p43
    %s46 = sadd.s32 %s45, 1
    %p49 = scmp.eq.s32.totalorder %s11, 1
    %p50 = scmp.ne.s32.totalorder %s45, %s47
    %p51 = scmp.eq.s32.totalorder %s11, 0
    %p52 = por %p50, %p51
    %p53 = scmp.ne.s32.totalorder %s45, %s47
    %p54 = scmp.eq.s32.totalorder %s16, 1
    %p55 = por %p53, %p54
    %p56 = scmp.ne.s32.totalorder %s47, %s48
    %p57 = scmp.eq.s32.totalorder %s16, 0
    %p58 = por %p56, %p57
    %p59 = scmp.ne.s32.totalorder %s47, %s48
    %p60 = scmp.eq.s32.totalorder %s17, 1
    %p61 = por %p59, %p60
    %p63 = scmp.ne.s32.totalorder %s48, %s62
    %p64 = scmp.eq.s32.totalorder %s17, 0
    %p65 = por %p63, %p64
    %s67 = sadd.s32 %s66, 1
    %p70 = scmp.eq.s32.totalorder %s11, 1
    %p71 = scmp.ne.s32.totalorder %s66, %s68
    %p72 = scmp.eq.s32.totalorder %s11, 0
    %p73 = por %p71, %p72
    %p74 = scmp.ne.s32.totalorder %s66, %s68
    %p75 = scmp.eq.s32.totalorder %s16, 1
    %p76 = por %p74, %p75
    %p77 = scmp.ne.s32.totalorder %s68, %s69
    %p78 = scmp.eq.s32.totalorder %s16, 0
    %p79 = por %p77, %p78
    %p80 = scmp.ne.s32.totalorder %s68, %s69
    %p81 = scmp.eq.s32.totalorder %s17, 1
    %p82 = por %p80, %p81
    %p84 = scmp.ne.s32.totalorder %s69, %s83
    %p85 = scmp.eq.s32.totalorder %s17, 0
    %p86 = por %p84, %p85
    %s88 = sadd.s32 %s87, 1
    %p91 = scmp.eq.s32.totalorder %s11, 1
    %p92 = scmp.ne.s32.totalorder %s87, %s89
    %p93 = scmp.eq.s32.totalorder %s11, 0
    %p94 = por %p92, %p93
    %p95 = scmp.ne.s32.totalorder %s87, %s89
    %p96 = scmp.eq.s32.totalorder %s16, 1
    %p97 = por %p95, %p96
    %p98 = scmp.ne.s32.totalorder %s89, %s90
    %p99 = scmp.eq.s32.totalorder %s16, 0
    %p100 = por %p98, %p99
    %p101 = scmp.ne.s32.totalorder %s89, %s90
    %p102 = scmp.eq.s32.totalorder %s17, 1
    %p103 = por %p101, %p102
    %p105 = scmp.ne.s32.totalorder %s90, %s104
    %p106 = scmp.eq.s32.totalorder %s17, 0
    %p107 = por %p105, %p106
    %s109 = sadd.s32 %s108, 1
    %p112 = scmp.eq.s32.totalorder %s11, 1
    %p113 = scmp.ne.s32.totalorder %s108, %s110
    %p114 = scmp.eq.s32.totalorder %s11, 0
    %p115 = por %p113, %p114
    %p116 = scmp.ne.s32.totalorder %s108, %s110
    %p117 = scmp.eq.s32.totalorder %s16, 1
    %p118 = por %p116, %p117
    %p119 = scmp.ne.s32.totalorder %s110, %s111
    %p120 = scmp.eq.s32.totalorder %s16, 0
    %p121 = por %p119, %p120
    %p122 = scmp.ne.s32.totalorder %s110, %s111
    %p123 = scmp.eq.s32.totalorder %s17, 1
    %p124 = por %p122, %p123
    %p126 = scmp.ne.s32.totalorder %s111, %s125
    %p127 = scmp.eq.s32.totalorder %s17, 0
    %p128 = por %p126, %p127
    %s129 = ssub.s32 %s11, %s18
    %p130 = scmp.eq.s32.totalorder %s129, 0
    %s132 = sadd.s32 %s131, 1
    %s133 = scalar_select %p130, %s131, %s132
    %p136 = pneg %p130
    %p137 = scmp.eq.s32.totalorder %s11, 1
    %p138 = por %p136, %p137
    %p139 = scmp.ne.s32.totalorder %s131, %s134
    %p140 = scmp.eq.s32.totalorder %s11, 0
    %p141 = por %p139, %p140
    %p142 = scmp.ne.s32.totalorder %s131, %s134
    %p143 = scmp.eq.s32.totalorder %s16, 1
    %p144 = por %p142, %p143
    %p145 = scmp.ne.s32.totalorder %s134, %s135
    %p146 = scmp.eq.s32.totalorder %s16, 0
    %p147 = por %p145, %p146
    %p148 = scmp.ne.s32.totalorder %s134, %s135
    %p149 = scmp.eq.s32.totalorder %s17, 1
    %p150 = por %p148, %p149
    %p152 = scmp.ne.s32.totalorder %s135, %s151
    %p153 = scmp.eq.s32.totalorder %s17, 0
    %p154 = por %p152, %p153
    %p155 = scmp.le.s32.totalorder 1, %s11
    %p156 = scmp.lt.s32.totalorder %s11, 3
    %p157 = pnand %p155, %p156
    %p158 = pneg %p157
    // Predicated region
    $region9: #{carrier_decoder_forward.1} parent=5 // pred_check
      _
    $region10: #{carrier_decoder_forward.1} parent=5 // pred_check_branch
      %160 = sbr.rel (%p157) target = $region12
    $region11: #{carrier_decoder_forward.1} parent=5 // pred_region
      %s161 = ssub.s32 %s11, 1
      // Predicated region
      $region13: #{carrier_decoder_forward.1} parent=11 // pred_check
        %p162 = pneg %p58
      $region14: #{carrier_decoder_forward.1} parent=11 // pred_check_branch
        %164 = sbr.rel (%p162) target = $region16
      $region15: #{carrier_decoder_forward.1} parent=11 // pred_region
        _
      $region16: #{carrier_decoder_forward.1} parent=11 // pred_fallthru
        _
      // Predicated region
      $region17: #{carrier_decoder_forward.1} parent=11 // pred_check
        %p165 = pneg %p79
      $region18: #{carrier_decoder_forward.1} parent=11 // pred_check_branch
        %167 = sbr.rel (%p165) target = $region20
      $region19: #{carrier_decoder_forward.1} parent=11 // pred_region
        _
      $region20: #{carrier_decoder_forward.1} parent=11 // pred_fallthru
        _
      // Predicated region
      $region21: #{carrier_decoder_forward.1} parent=11 // pred_check
        %p168 = pneg %p100
      $region22: #{carrier_decoder_forward.1} parent=11 // pred_check_branch
        %170 = sbr.rel (%p168) target = $region24
      $region23: #{carrier_decoder_forward.1} parent=11 // pred_region
        _
      $region24: #{carrier_decoder_forward.1} parent=11 // pred_fallthru
        _
      // Predicated region
      $region25: #{carrier_decoder_forward.1} parent=11 // pred_check
        %p171 = pneg %p121
      $region26: #{carrier_decoder_forward.1} parent=11 // pred_check_branch
        %173 = sbr.rel (%p171) target = $region28
      $region27: #{carrier_decoder_forward.1} parent=11 // pred_region
        _
      $region28: #{carrier_decoder_forward.1} parent=11 // pred_fallthru
        _
    $region12: #{carrier_decoder_forward.1} parent=5 // pred_fallthru
      _
    %p174 = scmp.lt.s32.totalorder %s11, 2
    // Predicated region
    $region29: #{carrier_decoder_forward.1} parent=5 // pred_check
      %p175 = pneg %p174
    $region30: #{carrier_decoder_forward.1} parent=5 // pred_check_branch
      %177 = sbr.rel (%p175) target = $region32
    $region31: #{carrier_decoder_forward.1} parent=5 // pred_region
      // Predicated region
      $region33: #{carrier_decoder_forward.1} parent=31 // pred_check
        %p178 = pneg %p31
      $region34: #{carrier_decoder_forward.1} parent=31 // pred_check_branch
        %180 = sbr.rel (%p178) target = $region36
      $region35: #{carrier_decoder_forward.1} parent=31 // pred_region
        %p181 = scmp.lt.s32.totalorder %s11, 1
        %s182 = scalar_select %p181, %s11, 1
        %s183 = smul.addr %s182, 4
        %s184 = smul.addr %s183, 4
        %s185 = scalar_lea.vmem %s0, %s184
      $region36: #{carrier_decoder_forward.1} parent=31 // pred_fallthru
        _
    $region32: #{carrier_decoder_forward.1} parent=5 // pred_fallthru
      _
    %p186 = scmp.le.s32.totalorder 1, %s11
    %p187 = scmp.lt.s32.totalorder %s11, 3
    %p188 = pnand %p186, %p187
    %p189 = pneg %p188
    // Predicated region
    $region37: #{carrier_decoder_forward.1} parent=5 // pred_check
      _
    $region38: #{carrier_decoder_forward.1} parent=5 // pred_check_branch
      %191 = sbr.rel (%p188) target = $region40
    $region39: #{carrier_decoder_forward.1} parent=5 // pred_region
      %s192 = ssub.s32 %s11, 1
      %p193 = scmp.lt.s32.totalorder %s16, 1
      %s194 = scalar_select %p193, %s16, 1
      %s195 = smul.addr %s194, 4
      %s196 = smul.addr %s195, 4
      %s197 = scalar_lea.vmem %s0, %s196
      %p198 = pneg %p37
      %p199 = pneg %p34
      %p200 = pneg %p58
      %p201 = pneg %p55
      %p202 = pneg %p79
      %p203 = pneg %p76
      %p204 = pneg %p100
      %p205 = pneg %p97
      %p206 = pneg %p121
      %p207 = pneg %p118
      %p208 = pneg %p147
      %p209 = pneg %p144
      %p210 = scmp.lt.s32.totalorder %s16, 1
      %s211 = scalar_select %p210, %s16, 1
      %s212 = smul.addr %s211, 3
      %s213 = scalar_lea.vmem %s5, %s212
      %p214 = scmp.lt.s32.totalorder %s16, 1
      %s215 = scalar_select %p214, %s16, 1
      %s216 = smul.addr %s215, 4
      %s217 = smul.addr %s216, 4
      %s218 = scalar_lea.vmem %s0, %s217
      %p219 = scmp.lt.s32.totalorder %s16, 1
      %s220 = scalar_select %p219, %s16, 1
      %s221 = smul.addr %s220, 3
      %s222 = scalar_lea.vmem %s5, %s221
      %v225 = vld [vmem:[%s1] sm:$0x7]
      %vm226 = vcmask 1041408
      %vm227 = vcmask 1043458
      %vm228 = vmor %vm227, %vm226
      %vm229 = vcmask 1045508
      %vm230 = vmor %vm229, %vm228
      %vm231 = vcmask 588806
      %vm232 = vmor %vm231, %vm230
      %233 = vst.msk [vmem:[#allocation2] sm:$0xff] %vm232, 0
      %v234 = vld [vmem:[%s218] sm:$0xff]
      %v235 = vld [vmem:[%s218 + $0x8] sm:$0xff]
      %236 = vst [vmem:[#allocation3] sm:$0xff] %v234
      %237 = vst [vmem:[#allocation3 + $0x8] sm:$0xf] %v235
      %240 = vrot.lane.b32.xlu0 %v234, 127
      %v241 = vpop.permute.xlu0 %240
      %242 = vrot.lane.b32.xlu0 %v235, 127
      %v243 = vpop.permute.xlu0 %242
      %v244 = vrot.slane %v241, 4
      %v245 = vrot.slane %v243, 4
      %vm246 = vcmask 1043456
      %v247 = vsel %vm246, %v244, %v245
      %vm248 = vcmask 1039360
      %v249 = vsel %vm248, %v241, %v247
      %v250 = vsel %vm248, %v243, %v245
      %253 = vst [vmem:[#allocation3 + $0xc] sm:$0xff] %v249
      %254 = vst [vmem:[#allocation3 + $0x14] sm:$0xf] %v250
      %255 = vrot.lane.b32.xlu0 %v234, 126
      %v256 = vpop.permute.xlu0 %255
      %257 = vrot.lane.b32.xlu0 %v235, 126
      %v258 = vpop.permute.xlu0 %257
      %v259 = vrot.slane %v256, 4
      %v260 = vrot.slane %v258, 4
      %v261 = vsel %vm246, %v259, %v260
      %vm262 = vcmask 1031168
      %v263 = vsel %vm262, %v256, %v261
      %v264 = vsel %vm262, %v258, %v260
      %267 = vst [vmem:[#allocation3 + $0x18] sm:$0xff] %v263
      %268 = vst [vmem:[#allocation3 + $0x20] sm:$0xf] %v264
      %269 = vrot.lane.b32.xlu0 %v234, 104
      %v270 = vpop.permute.xlu0 %269
      %271 = vrot.lane.b32.xlu0 %v235, 104
      %v272 = vpop.permute.xlu0 %271
      %v273 = vrot.slane %v270, 4
      %v274 = vrot.slane %v272, 4
      %v275 = vsel %vm246, %v273, %v274
      %vm276 = vcmask 850944
      %v277 = vsel %vm276, %v270, %v275
      %v278 = vsel %vm276, %v272, %v274
      %281 = vst [vmem:[#allocation3 + $0x24] sm:$0xff] %v277
      %282 = vst [vmem:[#allocation3 + $0x2c] sm:$0xf] %v278
      %283 = vrot.lane.b32.xlu0 %v234, 103
      %v284 = vpop.permute.xlu0 %283
      %285 = vrot.lane.b32.xlu0 %v235, 103
      %v286 = vpop.permute.xlu0 %285
      %v287 = vrot.slane %v284, 4
      %v288 = vrot.slane %v286, 4
      %v289 = vsel %vm246, %v287, %v288
      %vm290 = vcmask 842752
      %v291 = vsel %vm290, %v284, %v289
      %v292 = vsel %vm290, %v286, %v288
      %295 = vst [vmem:[#allocation3 + $0x30] sm:$0xff] %v291
      %296 = vst [vmem:[#allocation3 + $0x38] sm:$0xf] %v292
      %297 = vrot.lane.b32.xlu0 %v234, 102
      %v298 = vpop.permute.xlu0 %297
      %299 = vrot.lane.b32.xlu0 %v235, 102
      %v300 = vpop.permute.xlu0 %299
      %v301 = vrot.slane %v298, 4
      %v302 = vrot.slane %v300, 4
      %v303 = vsel %vm246, %v301, %v302
      %vm304 = vcmask 834560
      %v305 = vsel %vm304, %v298, %v303
      %v306 = vsel %vm304, %v300, %v302
      %309 = vst [vmem:[#allocation3 + $0x3c] sm:$0xff] %v305
      %310 = vst [vmem:[#allocation3 + $0x44] sm:$0xf] %v306
      %311 = vrot.lane.b32.xlu0 %v234, 80
      %v312 = vpop.permute.xlu0 %311
      %313 = vrot.lane.b32.xlu0 %v235, 80
      %v314 = vpop.permute.xlu0 %313
      %v315 = vrot.slane %v312, 4
      %v316 = vrot.slane %v314, 4
      %v317 = vsel %vm246, %v315, %v316
      %vm318 = vcmask 654336
      %v319 = vsel %vm318, %v312, %v317
      %v320 = vsel %vm318, %v314, %v316
      %323 = vst [vmem:[#allocation3 + $0x48] sm:$0xff] %v319
      %324 = vst [vmem:[#allocation3 + $0x50] sm:$0xf] %v320
      %325 = vrot.lane.b32.xlu0 %v234, 79
      %v326 = vpop.permute.xlu0 %325
      %327 = vrot.lane.b32.xlu0 %v235, 79
      %v328 = vpop.permute.xlu0 %327
      %v329 = vrot.slane %v326, 4
      %v330 = vrot.slane %v328, 4
      %v331 = vsel %vm246, %v329, %v330
      %vm332 = vcmask 646144
      %v333 = vsel %vm332, %v326, %v331
      %v334 = vsel %vm332, %v328, %v330
      %337 = vst [vmem:[#allocation3 + $0x54] sm:$0xff] %v333
      %338 = vst [vmem:[#allocation3 + $0x5c] sm:$0xf] %v334
      %339 = vrot.lane.b32.xlu0 %v234, 78
      %v340 = vpop.permute.xlu0 %339
      %341 = vrot.lane.b32.xlu0 %v235, 78
      %v342 = vpop.permute.xlu0 %341
      %v343 = vrot.slane %v340, 4
      %v344 = vrot.slane %v342, 4
      %v345 = vsel %vm246, %v343, %v344
      %vm346 = vcmask 637952
      %v347 = vsel %vm346, %v340, %v345
      %v348 = vsel %vm346, %v342, %v344
      %351 = vst [vmem:[#allocation3 + $0x60] sm:$0xff] %v347
      %352 = vst [vmem:[#allocation3 + $0x68] sm:$0xf] %v348
      %vm353 = vcmask 1040384
      %vm354 = vsmask.f32 256
      %vm355 = vmand %vm353, %vm354
      %vm356 = vcmask 1044484
      %vm357 = vsmask.f32 4352
      %vm358 = vmand %vm356, %vm357
      %vm359 = vmor %vm358, %vm355
      %v360 = vld [vmem:[#allocation3 + $0x6c] sm:$0x11]
      %v361 = vsel %vm359, 1065369472, %v360
      %362 = vst [vmem:[#allocation3 + $0x6c] sm:$0x11] %v361
      %v363 = vld [vmem:[#allocation3 + $0x74] sm:$0x1]
      %v364 = vsel %vm355, 1065369472, %v363
      %365 = vst [vmem:[#allocation3 + $0x74] sm:$0x1] %v364
      %v366 = vld [vmem:[%s2] sm:$0xf]
      %v367 = vld [vmem:[#allocation3] sm:$0xff]
      %v368 = vld [vmem:[#allocation3 + $0x8] sm:$0xf]
      %v369 = vld [vmem:[#allocation3 + $0xc] sm:$0xff]
      %v370 = vld [vmem:[#allocation3 + $0x14] sm:$0xf]
      %v371 = vld [vmem:[#allocation3 + $0x18] sm:$0xff]
      %v372 = vld [vmem:[#allocation3 + $0x20] sm:$0xf]
      %v373 = vld [vmem:[#allocation3 + $0x24] sm:$0xff]
      %v374 = vld [vmem:[#allocation3 + $0x2c] sm:$0xf]
      %v375 = vld [vmem:[#allocation3 + $0x30] sm:$0xff]
      %v376 = vld [vmem:[#allocation3 + $0x38] sm:$0xf]
      %v377 = vld [vmem:[#allocation3 + $0x3c] sm:$0xff]
      %v378 = vld [vmem:[#allocation3 + $0x44] sm:$0xf]
      %v379 = vld [vmem:[#allocation3 + $0x48] sm:$0xff]
      %v380 = vld [vmem:[#allocation3 + $0x50] sm:$0xf]
      %v381 = vld [vmem:[#allocation3 + $0x54] sm:$0xff]
      %v382 = vld [vmem:[#allocation3 + $0x5c] sm:$0xf]
      %v383 = vld [vmem:[#allocation3 + $0x60] sm:$0xff]
      %v384 = vld [vmem:[#allocation3 + $0x68] sm:$0xf]
      %v385 = vld [vmem:[#allocation3 + $0x6c] sm:$0x11]
      %v386 = vld [vmem:[#allocation3 + $0x74] sm:$0x1]
      %v407 = vunpack.c.l.b16 %v367
      %v408 = vunpack.c.h.b16 %v367
      %v409 = vunpack.c.l.b16 %v368
      %v410 = vunpack.c.l.b16 %v369
      %v411 = vunpack.c.h.b16 %v369
      %v412 = vunpack.c.l.b16 %v370
      %v413 = vunpack.c.l.b16 %v371
      %v414 = vunpack.c.h.b16 %v371
      %v415 = vunpack.c.l.b16 %v372
      %v416 = vunpack.c.l.b16 %v373
      %v417 = vunpack.c.h.b16 %v373
      %v418 = vunpack.c.l.b16 %v374
      %v419 = vunpack.c.l.b16 %v375
      %v420 = vunpack.c.h.b16 %v375
      %v421 = vunpack.c.l.b16 %v376
      %v422 = vunpack.c.l.b16 %v377
      %v423 = vunpack.c.h.b16 %v377
      %v424 = vunpack.c.l.b16 %v378
      %v425 = vunpack.c.l.b16 %v379
      %v426 = vunpack.c.h.b16 %v379
      %v427 = vunpack.c.l.b16 %v380
      %v428 = vunpack.c.l.b16 %v381
      %v429 = vunpack.c.h.b16 %v381
      %v430 = vunpack.c.l.b16 %v382
      %v431 = vunpack.c.l.b16 %v383
      %v432 = vunpack.c.h.b16 %v383
      %v433 = vunpack.c.l.b16 %v384
      %v434 = vunpack.c.l.b16 %v385
      %v435 = vunpack.c.h.b16 %v385
      %v436 = vunpack.c.l.b16 %v386
      %v437 = vpack.c.b16 %v410, %v407
      %v438 = vpack.c.b16 %v411, %v408
      %v439 = vpack.c.b16 %v412, %v409
      %v440 = vpack.c.b16 %v416, %v413
      %v441 = vpack.c.b16 %v417, %v414
      %v442 = vpack.c.b16 %v418, %v415
      %v443 = vpack.c.b16 %v422, %v419
      %v444 = vpack.c.b16 %v423, %v420
      %v445 = vpack.c.b16 %v424, %v421
      %v446 = vpack.c.b16 %v428, %v425
      %v447 = vpack.c.b16 %v429, %v426
      %v448 = vpack.c.b16 %v430, %v427
      %v449 = vpack.c.b16 %v434, %v431
      %v450 = vpack.c.b16 %v435, %v432
      %v451 = vpack.c.b16 %v436, %v433
      %vm464 = vcmask 596992
      %v466 = vsel %vm464, %v366, 0
      %vm468 = vcmask 1043456
      %vm469 = vcmask 1044480
      %v470 = vsel %vm468, 4294967295, 65535
      %v471 = vsel %vm469, %v470, 0
      %v473 = vand.u32 %v449, %v471
      %v476 = vand.u32 %v450, %v471
      %v479 = vand.u32 %v451, %v471
      %481 = vmatprep.subr.bf16.mxu0 %v438
      %482 = vmatpush1.bf16.msra.mxu0 %v437
      %483 = vmatprep.subr.bf16.mxu0 %v441
      %484 = vmatpush1.bf16.msra.mxu0 %v440
      %485 = vmatprep.subr.bf16.mxu0 %v444
      %486 = vmatpush1.bf16.msra.mxu0 %v443
      %487 = vmatprep.subr.bf16.mxu0 %v447
      %488 = vmatpush1.bf16.msra.mxu0 %v446
      %489 = vmatprep.subr.bf16.mxu0 %v476
      %490 = vmatpush1.bf16.msra.mxu0 %v473
      %491 = vmatprep.subr.bf16.mxu0 0
      %492 = vmatpush1.bf16.msra.mxu0 0
      %493 = vmatprep.subr.bf16.mxu0 0
      %494 = vmatpush1.bf16.msra.mxu0 0
      %495 = vmatprep.subr.bf16.mxu0 0
      %496 = vmatpush1.bf16.msra.mxu0 0
      %497 = vmatprep.subr.bf16.mxu0 0
      %498 = vmatpush1.bf16.msra.mxu0 0
      %499 = vmatprep.subr.bf16.mxu0 0
      %500 = vmatpush1.bf16.msra.mxu0 0
      %501 = vmatprep.subr.bf16.mxu0 0
      %502 = vmatpush1.bf16.msra.mxu0 0
      %503 = vmatprep.subr.bf16.mxu0 0
      %504 = vmatpush1.bf16.msra.mxu0 0
      %505 = vmatprep.subr.bf16.mxu0 0
      %506 = vmatpush1.bf16.msra.mxu0 0
      %507 = vmatprep.subr.bf16.mxu0 0
      %508 = vmatpush1.bf16.msra.mxu0 0
      %509 = vmatprep.subr.bf16.mxu0 0
      %510 = vmatpush1.bf16.msra.mxu0 0
      %511 = vmatprep.subr.bf16.mxu0 0
      %512 = vmatpush1.bf16.msra.mxu0 0
      %513 = vmatprep.mubr.bf16.mxu0 0
      %514 = vmatmul.mubr.bf16.gmra.mrb[0].mxu0 %v466
      %v515 = vpop.f32.mrb[0].mxu0
      %v516 = vadd.f32 0.0, %v515
      %v517 = vpop.f32.mrb[0].mxu0
      %v518 = vadd.f32 0.0, %v517
      %v519 = vpop.f32.mrb[0].mxu0
      %v520 = vpop.f32.mrb[0].mxu0
      %521 = vdwg.mxu0
      %522 = vmatprep.subr.bf16.mxu0 0
      %523 = vmatpush1.bf16.msra.mxu0 %v439
      %524 = vmatprep.subr.bf16.mxu0 0
      %525 = vmatpush1.bf16.msra.mxu0 %v442
      %526 = vmatprep.subr.bf16.mxu0 0
      %527 = vmatpush1.bf16.msra.mxu0 %v445
      %528 = vmatprep.subr.bf16.mxu0 0
      %529 = vmatpush1.bf16.msra.mxu0 %v448
      %530 = vmatprep.subr.bf16.mxu0 0
      %531 = vmatpush1.bf16.msra.mxu0 %v479
      %532 = vmatprep.subr.bf16.mxu0 0
      %533 = vmatpush1.bf16.msra.mxu0 0
      %534 = vmatprep.subr.bf16.mxu0 0
      %535 = vmatpush1.bf16.msra.mxu0 0
      %536 = vmatprep.subr.bf16.mxu0 0
      %537 = vmatpush1.bf16.msra.mxu0 0
      %538 = vmatprep.subr.bf16.mxu0 0
      %539 = vmatpush1.bf16.msra.mxu0 0
      %540 = vmatprep.subr.bf16.mxu0 0
      %541 = vmatpush1.bf16.msra.mxu0 0
      %542 = vmatprep.subr.bf16.mxu0 0
      %543 = vmatpush1.bf16.msra.mxu0 0
      %544 = vmatprep.subr.bf16.mxu0 0
      %545 = vmatpush1.bf16.msra.mxu0 0
      %546 = vmatprep.subr.bf16.mxu0 0
      %547 = vmatpush1.bf16.msra.mxu0 0
      %548 = vmatprep.subr.bf16.mxu0 0
      %549 = vmatpush1.bf16.msra.mxu0 0
      %550 = vmatprep.subr.bf16.mxu0 0
      %551 = vmatpush1.bf16.msra.mxu0 0
      %552 = vmatprep.subr.bf16.mxu0 0
      %553 = vmatpush1.bf16.msra.mxu0 0
      %554 = vmatprep.mubr.bf16.mxu0 0
      %555 = vmatmul.mubr.bf16.gmra.mrb[0].mxu0 %v466
      %v556 = vpop.f32.mrb[0].mxu0
      %v557 = vadd.f32 0.0, %v556
      %v558 = vpop.f32.mrb[0].mxu0
      %v559 = vpop.f32.mrb[0].mxu0
      %v560 = vpop.f32.mrb[0].mxu0
      %561 = vdwg.mxu0
      %v562 = vsub.f32 0.0, %v516
      %v563 = vsub.f32 0.0, %v518
      %v564 = vsub.f32 0.0, %v557
      %v565 = vmul.f32 %v562, 1.442695
      %v566 = vpow.pop %v565
      %v567 = vmul.f32 %v563, 1.442695
      %v568 = vpow.pop %v567
      %v569 = vmul.f32 %v564, 1.442695
      %v570 = vpow.pop %v569
      %v571 = vadd.f32 %v566, 1.0
      %v572 = vadd.f32 %v568, 1.0
      %v573 = vadd.f32 %v570, 1.0
      %v574 = vrcp.pop %v571
      %v575 = vrcp.pop %v572
      %v576 = vrcp.pop %v573
      %v580 = vrot.slane %v574, 4
      %v581 = vrot.slane %v575, 4
      %v582 = vrot.slane %v576, 4
      %v586 = vmul.f32 %v516, %v580
      %v587 = vmul.f32 %v518, %v581
      %v588 = vmul.f32 %v557, %v582
      %v590 = vlaneseq
      %v591 = vshrl.u32 %v590, 7
      %v592 = vsub.s32 0, %v591
      %v593 = vrot.slane %v225, %v592
      %v594 = vlaneseq
      %v595 = vshrl.u32 %v594, 7
      %v596 = vsub.s32 1, %v595
      %v597 = vrot.slane %v225, %v596
      %v598 = vlaneseq
      %v599 = vshrl.u32 %v598, 7
      %v600 = vsub.s32 2, %v599
      %v601 = vrot.slane %v225, %v600
      %v605 = vmul.f32 %v586, %v593
      %v606 = vmul.f32 %v587, %v597
      %v607 = vmul.f32 %v588, %v601
      %v608 = vpack.c.bf16 %v605, %v605
      %v609 = vpack.c.bf16 %v606, %v606
      %v610 = vpack.c.bf16 %v607, %v607
      %v614 = vcombine.low %v608, %v609
      %v616 = vunpack.c.l.s4 1983009808
      %v617 = vunpack.c.0.s8 %v616
      %v618 = vlaneseq
      %v619 = vshrl.u32 %v618, 7
      %v620 = vsub.s32 %v617, %v619
      %v621 = vrot.slane %v614, %v620
      %v623 = vunpack.c.l.s4 1983009808
      %v624 = vunpack.c.0.s8 %v623
      %v625 = vlaneseq
      %v626 = vshrl.u32 %v625, 7
      %v627 = vsub.s32 %v624, %v626
      %v628 = vrot.slane %v610, %v627
      %v629 = vcombine.low %v621, %v628
      %630 = vrot.lane.b32.xlu0 %v629, 25
      %v631 = vpop.permute.xlu0 %630
      %v632 = vrot.slane %v631, 6
      %vm633 = vcmask 203776
      %v634 = vsel %vm633, %v632, %v631
      %vm636 = vcmask 1041608
      %vm637 = vmor %vm227, %vm636
      %vm638 = vmor %vm229, %vm637
      %vm639 = vcmask 203782
      %vm640 = vmor %vm639, %vm638
      %641 = vst.msk [vmem:[#allocation2] sm:$0xff] %vm640, %v634
      %v642 = vld [vmem:[#allocation2] sm:$0xff]
      %v644 = vcombine.high %v642, %v642
      %v646 = vunpack.c.l.s4 1983009808
      %v647 = vunpack.c.0.s8 %v646
      %v648 = vlaneseq
      %v649 = vshrl.u32 %v648, 7
      %v650 = vsub.s32 %v647, %v649
      %v651 = vrot.slane %v642, %v650
      %v653 = vunpack.c.l.s4 1983009808
      %v654 = vunpack.c.0.s8 %v653
      %v655 = vlaneseq
      %v656 = vshrl.u32 %v655, 7
      %v657 = vsub.s32 %v654, %v656
      %v658 = vrot.slane %v644, %v657
      %661 = vst [vmem:[#allocation3] sm:$0x33] %v651
      %662 = vst [vmem:[#allocation3 + $0x8] sm:$0x3] %v658
      %v663 = vcombine.low %v642, %v642
      %v665 = vunpack.c.l.s4 1983009808
      %v666 = vunpack.c.0.s8 %v665
      %v667 = vlaneseq
      %v668 = vshrl.u32 %v667, 7
      %v669 = vsub.s32 %v666, %v668
      %v670 = vrot.slane %v663, %v669
      %671 = vrot.lane.b32.xlu0 %v670, 127
      %v672 = vpop.permute.xlu0 %671
      %673 = vrot.lane.b32.xlu0 %v651, 127
      %v674 = vpop.permute.xlu0 %673
      %v675 = vrot.slane %v672, 4
      %v676 = vrot.slane %v674, 4
      %v677 = vsel %vm246, %v675, %v676
      %v678 = vsel %vm248, %v672, %v677
      %v679 = vsel %vm248, %v674, %v676
      %682 = vst [vmem:[#allocation3] sm:$0xcc] %v678
      %683 = vst [vmem:[#allocation3 + $0x8] sm:$0xc] %v679
      %684 = vrot.lane.b32.xlu0 %v651, 126
      %v685 = vpop.permute.xlu0 %684
      %686 = vrot.lane.b32.xlu0 %v658, 126
      %v687 = vpop.permute.xlu0 %686
      %v688 = vrot.slane %v685, 4
      %v689 = vrot.slane %v687, 4
      %v690 = vsel %vm246, %v688, %v689
      %v691 = vsel %vm262, %v685, %v690
      %v692 = vsel %vm262, %v687, %v689
      %695 = vst [vmem:[#allocation3 + $0xc] sm:$0x33] %v691
      %696 = vst [vmem:[#allocation3 + $0x14] sm:$0x3] %v692
      %697 = vrot.lane.b32.xlu0 %v670, 104
      %v698 = vpop.permute.xlu0 %697
      %699 = vrot.lane.b32.xlu0 %v651, 104
      %v700 = vpop.permute.xlu0 %699
      %v701 = vrot.slane %v698, 4
      %v702 = vrot.slane %v700, 4
      %v703 = vsel %vm246, %v701, %v702
      %v704 = vsel %vm276, %v698, %v703
      %v705 = vsel %vm276, %v700, %v702
      %708 = vst [vmem:[#allocation3 + $0xc] sm:$0xcc] %v704
      %709 = vst [vmem:[#allocation3 + $0x14] sm:$0xc] %v705
      %710 = vrot.lane.b32.xlu0 %v651, 103
      %v711 = vpop.permute.xlu0 %710
      %712 = vrot.lane.b32.xlu0 %v658, 103
      %v713 = vpop.permute.xlu0 %712
      %v714 = vrot.slane %v711, 4
      %v715 = vrot.slane %v713, 4
      %v716 = vsel %vm246, %v714, %v715
      %v717 = vsel %vm290, %v711, %v716
      %v718 = vsel %vm290, %v713, %v715
      %721 = vst [vmem:[#allocation3 + $0x18] sm:$0x33] %v717
      %722 = vst [vmem:[#allocation3 + $0x20] sm:$0x3] %v718
      %723 = vrot.lane.b32.xlu0 %v670, 102
      %v724 = vpop.permute.xlu0 %723
      %725 = vrot.lane.b32.xlu0 %v651, 102
      %v726 = vpop.permute.xlu0 %725
      %v727 = vrot.slane %v724, 4
      %v728 = vrot.slane %v726, 4
      %v729 = vsel %vm246, %v727, %v728
      %v730 = vsel %vm304, %v724, %v729
      %v731 = vsel %vm304, %v726, %v728
      %734 = vst [vmem:[#allocation3 + $0x18] sm:$0xcc] %v730
      %735 = vst [vmem:[#allocation3 + $0x20] sm:$0xc] %v731
      %736 = vrot.lane.b32.xlu0 %v651, 80
      %v737 = vpop.permute.xlu0 %736
      %738 = vrot.lane.b32.xlu0 %v658, 80
      %v739 = vpop.permute.xlu0 %738
      %v740 = vrot.slane %v737, 4
      %v741 = vrot.slane %v739, 4
      %v742 = vsel %vm246, %v740, %v741
      %v743 = vsel %vm318, %v737, %v742
      %v744 = vsel %vm318, %v739, %v741
      %747 = vst [vmem:[#allocation3 + $0x24] sm:$0x33] %v743
      %748 = vst [vmem:[#allocation3 + $0x2c] sm:$0x3] %v744
      %749 = vrot.lane.b32.xlu0 %v670, 79
      %v750 = vpop.permute.xlu0 %749
      %751 = vrot.lane.b32.xlu0 %v651, 79
      %v752 = vpop.permute.xlu0 %751
      %v753 = vrot.slane %v750, 4
      %v754 = vrot.slane %v752, 4
      %v755 = vsel %vm246, %v753, %v754
      %v756 = vsel %vm332, %v750, %v755
      %v757 = vsel %vm332, %v752, %v754
      %760 = vst [vmem:[#allocation3 + $0x24] sm:$0xcc] %v756
      %761 = vst [vmem:[#allocation3 + $0x2c] sm:$0xc] %v757
      %762 = vrot.lane.b32.xlu0 %v651, 78
      %v763 = vpop.permute.xlu0 %762
      %764 = vrot.lane.b32.xlu0 %v658, 78
      %v765 = vpop.permute.xlu0 %764
      %v766 = vrot.slane %v763, 4
      %v767 = vrot.slane %v765, 4
      %v768 = vsel %vm246, %v766, %v767
      %v769 = vsel %vm346, %v763, %v768
      %v770 = vsel %vm346, %v765, %v767
      %773 = vst [vmem:[#allocation3 + $0x30] sm:$0x33] %v769
      %774 = vst [vmem:[#allocation3 + $0x38] sm:$0x3] %v770
      %vm775 = vcmask 1042434
      %vm776 = vsmask.f32 2304
      %vm777 = vmand %vm775, %vm776
      %vm778 = vcmask 1046534
      %vm779 = vsmask.f32 6400
      %vm780 = vmand %vm778, %vm779
      %vm781 = vmor %vm780, %vm777
      %v782 = vld [vmem:[#allocation3 + $0x30] sm:$0x44]
      %v783 = vsel %vm781, 1065369472, %v782
      %784 = vst [vmem:[#allocation3 + $0x30] sm:$0x44] %v783
      %v785 = vld [vmem:[#allocation3 + $0x38] sm:$0x4]
      %v786 = vsel %vm777, 1065369472, %v785
      %787 = vst [vmem:[#allocation3 + $0x38] sm:$0x4] %v786
      %v788 = vld [vmem:[%s3] sm:$0x3]
      %v789 = vld [vmem:[#allocation3] sm:$0xff]
      %v790 = vld [vmem:[#allocation3 + $0x8] sm:$0xf]
      %v791 = vld [vmem:[#allocation3 + $0xc] sm:$0xff]
      %v792 = vld [vmem:[#allocation3 + $0x14] sm:$0xf]
      %v793 = vld [vmem:[#allocation3 + $0x18] sm:$0xff]
      %v794 = vld [vmem:[#allocation3 + $0x20] sm:$0xf]
      %v795 = vld [vmem:[#allocation3 + $0x24] sm:$0xff]
      %v796 = vld [vmem:[#allocation3 + $0x2c] sm:$0xf]
      %v797 = vld [vmem:[#allocation3 + $0x30] sm:$0x77]
      %v798 = vld [vmem:[#allocation3 + $0x38] sm:$0x7]
      %v809 = vunpack.c.l.b16 %v789
      %v810 = vunpack.c.h.b16 %v789
      %v811 = vunpack.c.l.b16 %v790
      %v812 = vunpack.c.l.b16 %v791
      %v813 = vunpack.c.h.b16 %v791
      %v814 = vunpack.c.l.b16 %v792
      %v815 = vunpack.c.l.b16 %v793
      %v816 = vunpack.c.h.b16 %v793
      %v817 = vunpack.c.l.b16 %v794
      %v818 = vunpack.c.l.b16 %v795
      %v819 = vunpack.c.h.b16 %v795
      %v820 = vunpack.c.l.b16 %v796
      %v821 = vunpack.c.l.b16 %v797
      %v822 = vunpack.c.h.b16 %v797
      %v823 = vunpack.c.l.b16 %v798
      %v824 = vpack.c.b16 %v812, %v809
      %v825 = vpack.c.b16 %v813, %v810
      %v826 = vpack.c.b16 %v814, %v811
      %v827 = vpack.c.b16 %v818, %v815
      %v828 = vpack.c.b16 %v819, %v816
      %v829 = vpack.c.b16 %v820, %v817
      %v830 = vpack.c.b16 %v821, %v821
      %v831 = vpack.c.b16 %v822, %v822
      %v832 = vpack.c.b16 %v823, %v823
      %vm839 = vcmask 302080
      %v841 = vsel %vm839, %v788, 0
      %vm843 = vcmask 1042432
      %v844 = vsel %vm226, 4294967295, 65535
      %v845 = vsel %vm843, %v844, 0
      %v847 = vand.u32 %v830, %v845
      %v850 = vand.u32 %v831, %v845
      %v853 = vand.u32 %v832, %v845
      %855 = vmatprep.subr.bf16.mxu0 %v825
      %856 = vmatpush1.bf16.msra.mxu0 %v824
      %857 = vmatprep.subr.bf16.mxu0 %v828
      %858 = vmatpush1.bf16.msra.mxu0 %v827
      %859 = vmatprep.subr.bf16.mxu0 %v850
      %860 = vmatpush1.bf16.msra.mxu0 %v847
      %861 = vmatprep.subr.bf16.mxu0 0
      %862 = vmatpush1.bf16.msra.mxu0 0
      %863 = vmatprep.subr.bf16.mxu0 0
      %864 = vmatpush1.bf16.msra.mxu0 0
      %865 = vmatprep.subr.bf16.mxu0 0
      %866 = vmatpush1.bf16.msra.mxu0 0
      %867 = vmatprep.subr.bf16.mxu0 0
      %868 = vmatpush1.bf16.msra.mxu0 0
      %869 = vmatprep.subr.bf16.mxu0 0
      %870 = vmatpush1.bf16.msra.mxu0 0
      %871 = vmatprep.subr.bf16.mxu0 0
      %872 = vmatpush1.bf16.msra.mxu0 0
      %873 = vmatprep.subr.bf16.mxu0 0
      %874 = vmatpush1.bf16.msra.mxu0 0
      %875 = vmatprep.subr.bf16.mxu0 0
      %876 = vmatpush1.bf16.msra.mxu0 0
      %877 = vmatprep.subr.bf16.mxu0 0
      %878 = vmatpush1.bf16.msra.mxu0 0
      %879 = vmatprep.subr.bf16.mxu0 0
      %880 = vmatpush1.bf16.msra.mxu0 0
      %881 = vmatprep.subr.bf16.mxu0 0
      %882 = vmatpush1.bf16.msra.mxu0 0
      %883 = vmatprep.subr.bf16.mxu0 0
      %884 = vmatpush1.bf16.msra.mxu0 0
      %885 = vmatprep.subr.bf16.mxu0 0
      %886 = vmatpush1.bf16.msra.mxu0 0
      %887 = vmatprep.mubr.bf16.mxu0 0
      %888 = vmatmul.mubr.bf16.gmra.mrb[0].mxu0 %v841
      %v889 = vpop.f32.mrb[0].mxu0
      %v890 = vadd.f32 0.0, %v889
      %v891 = vpop.f32.mrb[0].mxu0
      %v892 = vadd.f32 0.0, %v891
      %v893 = vpop.f32.mrb[0].mxu0
      %v894 = vpop.f32.mrb[0].mxu0
      %895 = vdwg.mxu0
      %896 = vmatprep.subr.bf16.mxu0 0
      %897 = vmatpush1.bf16.msra.mxu0 %v826
      %898 = vmatprep.subr.bf16.mxu0 0
      %899 = vmatpush1.bf16.msra.mxu0 %v829
      %900 = vmatprep.subr.bf16.mxu0 0
      %901 = vmatpush1.bf16.msra.mxu0 %v853
      %902 = vmatprep.subr.bf16.mxu0 0
      %903 = vmatpush1.bf16.msra.mxu0 0
      %904 = vmatprep.subr.bf16.mxu0 0
      %905 = vmatpush1.bf16.msra.mxu0 0
      %906 = vmatprep.subr.bf16.mxu0 0
      %907 = vmatpush1.bf16.msra.mxu0 0
      %908 = vmatprep.subr.bf16.mxu0 0
      %909 = vmatpush1.bf16.msra.mxu0 0
      %910 = vmatprep.subr.bf16.mxu0 0
      %911 = vmatpush1.bf16.msra.mxu0 0
      %912 = vmatprep.subr.bf16.mxu0 0
      %913 = vmatpush1.bf16.msra.mxu0 0
      %914 = vmatprep.subr.bf16.mxu0 0
      %915 = vmatpush1.bf16.msra.mxu0 0
      %916 = vmatprep.subr.bf16.mxu0 0
      %917 = vmatpush1.bf16.msra.mxu0 0
      %918 = vmatprep.subr.bf16.mxu0 0
      %919 = vmatpush1.bf16.msra.mxu0 0
      %920 = vmatprep.subr.bf16.mxu0 0
      %921 = vmatpush1.bf16.msra.mxu0 0
      %922 = vmatprep.subr.bf16.mxu0 0
      %923 = vmatpush1.bf16.msra.mxu0 0
      %924 = vmatprep.subr.bf16.mxu0 0
      %925 = vmatpush1.bf16.msra.mxu0 0
      %926 = vmatprep.subr.bf16.mxu0 0
      %927 = vmatpush1.bf16.msra.mxu0 0
      %928 = vmatprep.mubr.bf16.mxu0 0
      %929 = vmatmul.mubr.bf16.gmra.mrb[0].mxu0 %v841
      %v930 = vpop.f32.mrb[0].mxu0
      %v931 = vadd.f32 0.0, %v930
      %v932 = vpop.f32.mrb[0].mxu0
      %v933 = vpop.f32.mrb[0].mxu0
      %v934 = vpop.f32.mrb[0].mxu0
      %935 = vdwg.mxu0
      %v936 = vsub.f32 0.0, %v890
      %v937 = vsub.f32 0.0, %v892
      %v938 = vsub.f32 0.0, %v931
      %v939 = vmul.f32 %v936, 1.442695
      %v940 = vpow.pop %v939
      %v941 = vmul.f32 %v937, 1.442695
      %v942 = vpow.pop %v941
      %v943 = vmul.f32 %v938, 1.442695
      %v944 = vpow.pop %v943
      %v945 = vadd.f32 %v940, 1.0
      %v946 = vadd.f32 %v942, 1.0
      %v947 = vadd.f32 %v944, 1.0
      %v948 = vrcp.pop %v945
      %v949 = vrcp.pop %v946
      %v950 = vrcp.pop %v947
      %v954 = vrot.slane %v948, 2
      %v955 = vrot.slane %v949, 2
      %v956 = vrot.slane %v950, 2
      %v960 = vmul.f32 %v890, %v954
      %v961 = vmul.f32 %v892, %v955
      %v962 = vmul.f32 %v931, %v956
      %v963 = vmul.f32 %v960, %v593
      %v964 = vmul.f32 %v961, %v597
      %v965 = vmul.f32 %v962, %v601
      %v966 = vpack.c.bf16 %v963, %v963
      %v967 = vpack.c.bf16 %v964, %v964
      %v968 = vpack.c.bf16 %v965, %v965
      %v972 = vcombine.low %v966, %v967
      %v974 = vunpack.c.l.s4 1983009808
      %v975 = vunpack.c.0.s8 %v974
      %v976 = vlaneseq
      %v977 = vshrl.u32 %v976, 7
      %v978 = vsub.s32 %v975, %v977
      %v979 = vrot.slane %v972, %v978
      %v981 = vunpack.c.l.s4 1983009808
      %v982 = vunpack.c.0.s8 %v981
      %v983 = vlaneseq
      %v984 = vshrl.u32 %v983, 7
      %v985 = vsub.s32 %v982, %v984
      %v986 = vrot.slane %v968, %v985
      %v987 = vcombine.low %v979, %v986
      %988 = vrot.lane.b32.xlu0 %v987, 25
      %v989 = vpop.permute.xlu0 %988
      %v990 = vrot.slane %v989, 6
      %v991 = vsel %vm633, %v990, %v989
      %vm993 = vcmask 1040584
      %vm994 = vcmask 1042434
      %vm995 = vmor %vm994, %vm993
      %vm996 = vcmask 1044484
      %vm997 = vmor %vm996, %vm995
      %vm998 = vcmask 202758
      %vm999 = vmor %vm998, %vm997
      %1000 = vst.msk [vmem:[#allocation2] sm:$0x55] %vm999, %v991
      %v1001 = vld [vmem:[#allocation2] sm:$0x55]
      %v1003 = vcombine.high %v1001, %v1001
      %v1005 = vunpack.c.l.s4 1983009808
      %v1006 = vunpack.c.0.s8 %v1005
      %v1007 = vlaneseq
      %v1008 = vshrl.u32 %v1007, 7
      %v1009 = vsub.s32 %v1006, %v1008
      %v1010 = vrot.slane %v1001, %v1009
      %v1012 = vunpack.c.l.s4 1983009808
      %v1013 = vunpack.c.0.s8 %v1012
      %v1014 = vlaneseq
      %v1015 = vshrl.u32 %v1014, 7
      %v1016 = vsub.s32 %v1013, %v1015
      %v1017 = vrot.slane %v1003, %v1016
      %1020 = vst [vmem:[#allocation3] sm:$0x11] %v1010
      %1021 = vst [vmem:[#allocation3 + $0x8] sm:$0x1] %v1017
      %v1022 = vrot.slane %v1010, 7
      %v1023 = vrot.slane %v1017, 7
      %1024 = vrot.lane.b32.xlu0 %v1022, 127
      %v1025 = vpop.permute.xlu0 %1024
      %1026 = vrot.lane.b32.xlu0 %v1023, 127
      %v1027 = vpop.permute.xlu0 %1026
      %v1028 = vrot.slane %v1025, 4
      %v1029 = vrot.slane %v1027, 4
      %v1030 = vsel %vm246, %v1028, %v1029
      %v1031 = vsel %vm248, %v1025, %v1030
      %v1032 = vsel %vm248, %v1027, %v1029
      %1035 = vst [vmem:[#allocation3] sm:$0x22] %v1031
      %1036 = vst [vmem:[#allocation3 + $0x8] sm:$0x2] %v1032
      %v1037 = vcombine.low %v1001, %v1001
      %v1039 = vunpack.c.l.s4 1983009808
      %v1040 = vunpack.c.0.s8 %v1039
      %v1041 = vlaneseq
      %v1042 = vshrl.u32 %v1041, 7
      %v1043 = vsub.s32 %v1040, %v1042
      %v1044 = vrot.slane %v1037, %v1043
      %1045 = vrot.lane.b32.xlu0 %v1044, 126
      %v1046 = vpop.permute.xlu0 %1045
      %1047 = vrot.lane.b32.xlu0 %v1010, 126
      %v1048 = vpop.permute.xlu0 %1047
      %v1049 = vrot.slane %v1046, 4
      %v1050 = vrot.slane %v1048, 4
      %v1051 = vsel %vm246, %v1049, %v1050
      %v1052 = vsel %vm262, %v1046, %v1051
      %v1053 = vsel %vm262, %v1048, %v1050
      %1056 = vst [vmem:[#allocation3] sm:$0x44] %v1052
      %1057 = vst [vmem:[#allocation3 + $0x8] sm:$0x4] %v1053
      %v1058 = vrot.slane %v1010, 5
      %v1059 = vrot.slane %v1017, 5
      %1060 = vrot.lane.b32.xlu0 %v1058, 104
      %v1061 = vpop.permute.xlu0 %1060
      %1062 = vrot.lane.b32.xlu0 %v1059, 104
      %v1063 = vpop.permute.xlu0 %1062
      %v1064 = vrot.slane %v1061, 4
      %v1065 = vrot.slane %v1063, 4
      %v1066 = vsel %vm246, %v1064, %v1065
      %v1067 = vsel %vm276, %v1061, %v1066
      %v1068 = vsel %vm276, %v1063, %v1065
      %1071 = vst [vmem:[#allocation3] sm:$0x88] %v1067
      %1072 = vst [vmem:[#allocation3 + $0x8] sm:$0x8] %v1068
      %1073 = vrot.lane.b32.xlu0 %v1010, 103
      %v1074 = vpop.permute.xlu0 %1073
      %1075 = vrot.lane.b32.xlu0 %v1017, 103
      %v1076 = vpop.permute.xlu0 %1075
      %v1077 = vrot.slane %v1074, 4
      %v1078 = vrot.slane %v1076, 4
      %v1079 = vsel %vm246, %v1077, %v1078
      %v1080 = vsel %vm290, %v1074, %v1079
      %v1081 = vsel %vm290, %v1076, %v1078
      %1084 = vst [vmem:[#allocation3 + $0xc] sm:$0x11] %v1080
      %1085 = vst [vmem:[#allocation3 + $0x14] sm:$0x1] %v1081
      %1086 = vrot.lane.b32.xlu0 %v1022, 102
      %v1087 = vpop.permute.xlu0 %1086
      %1088 = vrot.lane.b32.xlu0 %v1023, 102
      %v1089 = vpop.permute.xlu0 %1088
      %v1090 = vrot.slane %v1087, 4
      %v1091 = vrot.slane %v1089, 4
      %v1092 = vsel %vm246, %v1090, %v1091
      %v1093 = vsel %vm304, %v1087, %v1092
      %v1094 = vsel %vm304, %v1089, %v1091
      %1097 = vst [vmem:[#allocation3 + $0xc] sm:$0x22] %v1093
      %1098 = vst [vmem:[#allocation3 + $0x14] sm:$0x2] %v1094
      %1099 = vrot.lane.b32.xlu0 %v1044, 80
      %v1100 = vpop.permute.xlu0 %1099
      %1101 = vrot.lane.b32.xlu0 %v1010, 80
      %v1102 = vpop.permute.xlu0 %1101
      %v1103 = vrot.slane %v1100, 4
      %v1104 = vrot.slane %v1102, 4
      %v1105 = vsel %vm246, %v1103, %v1104
      %v1106 = vsel %vm318, %v1100, %v1105
      %v1107 = vsel %vm318, %v1102, %v1104
      %1110 = vst [vmem:[#allocation3 + $0xc] sm:$0x44] %v1106
      %1111 = vst [vmem:[#allocation3 + $0x14] sm:$0x4] %v1107
      %1112 = vrot.lane.b32.xlu0 %v1058, 79
      %v1113 = vpop.permute.xlu0 %1112
      %1114 = vrot.lane.b32.xlu0 %v1059, 79
      %v1115 = vpop.permute.xlu0 %1114
      %v1116 = vrot.slane %v1113, 4
      %v1117 = vrot.slane %v1115, 4
      %v1118 = vsel %vm246, %v1116, %v1117
      %v1119 = vsel %vm332, %v1113, %v1118
      %v1120 = vsel %vm332, %v1115, %v1117
      %1123 = vst [vmem:[#allocation3 + $0xc] sm:$0x88] %v1119
      %1124 = vst [vmem:[#allocation3 + $0x14] sm:$0x8] %v1120
      %1125 = vrot.lane.b32.xlu0 %v1010, 78
      %v1126 = vpop.permute.xlu0 %1125
      %1127 = vrot.lane.b32.xlu0 %v1017, 78
      %v1128 = vpop.permute.xlu0 %1127
      %v1129 = vrot.slane %v1126, 4
      %v1130 = vrot.slane %v1128, 4
      %v1131 = vsel %vm246, %v1129, %v1130
      %v1132 = vsel %vm346, %v1126, %v1131
      %v1133 = vsel %vm346, %v1128, %v1130
      %1136 = vst [vmem:[#allocation3 + $0x18] sm:$0x11] %v1132
      %1137 = vst [vmem:[#allocation3 + $0x20] sm:$0x1] %v1133
      %vm1138 = vcmask 1041409
      %vm1139 = vsmask.f32 1280
      %vm1140 = vmand %vm1138, %vm1139
      %vm1141 = vcmask 1045509
      %vm1142 = vsmask.f32 5376
      %vm1143 = vmand %vm1141, %vm1142
      %vm1144 = vmor %vm1143, %vm1140
      %v1145 = vld [vmem:[#allocation3 + $0x18] sm:$0x22]
      %v1146 = vsel %vm1144, 1065369472, %v1145
      %1147 = vst [vmem:[#allocation3 + $0x18] sm:$0x22] %v1146
      %v1148 = vld [vmem:[#allocation3 + $0x20] sm:$0x2]
      %v1149 = vsel %vm1140, 1065369472, %v1148
      %1150 = vst [vmem:[#allocation3 + $0x20] sm:$0x2] %v1149
      %v1151 = vld [vmem:[%s4] sm:$0x1]
      %v1152 = vld [vmem:[#allocation3] sm:$0xff]
      %v1153 = vld [vmem:[#allocation3 + $0x8] sm:$0xf]
      %v1154 = vld [vmem:[#allocation3 + $0xc] sm:$0xff]
      %v1155 = vld [vmem:[#allocation3 + $0x14] sm:$0xf]
      %v1156 = vld [vmem:[#allocation3 + $0x18] sm:$0x33]
      %v1157 = vld [vmem:[#allocation3 + $0x20] sm:$0x3]
      %v1164 = vunpack.c.l.b16 %v1152
      %v1165 = vunpack.c.h.b16 %v1152
      %v1166 = vunpack.c.l.b16 %v1153
      %v1167 = vunpack.c.l.b16 %v1154
      %v1168 = vunpack.c.h.b16 %v1154
      %v1169 = vunpack.c.l.b16 %v1155
      %v1170 = vunpack.c.l.b16 %v1156
      %v1171 = vunpack.c.h.b16 %v1156
      %v1172 = vunpack.c.l.b16 %v1157
      %v1173 = vpack.c.b16 %v1167, %v1164
      %v1174 = vpack.c.b16 %v1168, %v1165
      %v1175 = vpack.c.b16 %v1169, %v1166
      %v1176 = vpack.c.b16 %v1170, %v1170
      %v1177 = vpack.c.b16 %v1171, %v1171
      %v1178 = vpack.c.b16 %v1172, %v1172
      %vm1182 = vcmask 154624
      %v1184 = vsel %vm1182, %v1151, 0
      %vm1186 = vcmask 1040384
      %v1187 = vsel %vm1186, 4294967295, 65535
      %v1188 = vsel %vm226, %v1187, 0
      %v1190 = vand.u32 %v1176, %v1188
      %v1193 = vand.u32 %v1177, %v1188
      %v1196 = vand.u32 %v1178, %v1188
      %1198 = vmatprep.subr.bf16.mxu0 %v1174
      %1199 = vmatpush1.bf16.msra.mxu0 %v1173
      %1200 = vmatprep.subr.bf16.mxu0 %v1193
      %1201 = vmatpush1.bf16.msra.mxu0 %v1190
      %1202 = vmatprep.subr.bf16.mxu0 0
      %1203 = vmatpush1.bf16.msra.mxu0 0
      %1204 = vmatprep.subr.bf16.mxu0 0
      %1205 = vmatpush1.bf16.msra.mxu0 0
      %1206 = vmatprep.subr.bf16.mxu0 0
      %1207 = vmatpush1.bf16.msra.mxu0 0
      %1208 = vmatprep.subr.bf16.mxu0 0
      %1209 = vmatpush1.bf16.msra.mxu0 0
      %1210 = vmatprep.subr.bf16.mxu0 0
      %1211 = vmatpush1.bf16.msra.mxu0 0
      %1212 = vmatprep.subr.bf16.mxu0 0
      %1213 = vmatpush1.bf16.msra.mxu0 0
      %1214 = vmatprep.subr.bf16.mxu0 0
      %1215 = vmatpush1.bf16.msra.mxu0 0
      %1216 = vmatprep.subr.bf16.mxu0 0
      %1217 = vmatpush1.bf16.msra.mxu0 0
      %1218 = vmatprep.subr.bf16.mxu0 0
      %1219 = vmatpush1.bf16.msra.mxu0 0
      %1220 = vmatprep.subr.bf16.mxu0 0
      %1221 = vmatpush1.bf16.msra.mxu0 0
      %1222 = vmatprep.subr.bf16.mxu0 0
      %1223 = vmatpush1.bf16.msra.mxu0 0
      %1224 = vmatprep.subr.bf16.mxu0 0
      %1225 = vmatpush1.bf16.msra.mxu0 0
      %1226 = vmatprep.subr.bf16.mxu0 0
      %1227 = vmatpush1.bf16.msra.mxu0 0
      %1228 = vmatprep.subr.bf16.mxu0 0
      %1229 = vmatpush1.bf16.msra.mxu0 0
      %1230 = vmatprep.mubr.bf16.mxu0 0
      %1231 = vmatmul.mubr.bf16.gmra.mrb[0].mxu0 %v1184
      %v1232 = vpop.f32.mrb[0].mxu0
      %v1233 = vadd.f32 0.0, %v1232
      %v1234 = vpop.f32.mrb[0].mxu0
      %v1235 = vadd.f32 0.0, %v1234
      %v1236 = vpop.f32.mrb[0].mxu0
      %v1237 = vpop.f32.mrb[0].mxu0
      %1238 = vdwg.mxu0
      %1239 = vmatprep.subr.bf16.mxu0 0
      %1240 = vmatpush1.bf16.msra.mxu0 %v1175
      %1241 = vmatprep.subr.bf16.mxu0 0
      %1242 = vmatpush1.bf16.msra.mxu0 %v1196
      %1243 = vmatprep.subr.bf16.mxu0 0
      %1244 = vmatpush1.bf16.msra.mxu0 0
      %1245 = vmatprep.subr.bf16.mxu0 0
      %1246 = vmatpush1.bf16.msra.mxu0 0
      %1247 = vmatprep.subr.bf16.mxu0 0
      %1248 = vmatpush1.bf16.msra.mxu0 0
      %1249 = vmatprep.subr.bf16.mxu0 0
      %1250 = vmatpush1.bf16.msra.mxu0 0
      %1251 = vmatprep.subr.bf16.mxu0 0
      %1252 = vmatpush1.bf16.msra.mxu0 0
      %1253 = vmatprep.subr.bf16.mxu0 0
      %1254 = vmatpush1.bf16.msra.mxu0 0
      %1255 = vmatprep.subr.bf16.mxu0 0
      %1256 = vmatpush1.bf16.msra.mxu0 0
      %1257 = vmatprep.subr.bf16.mxu0 0
      %1258 = vmatpush1.bf16.msra.mxu0 0
      %1259 = vmatprep.subr.bf16.mxu0 0
      %1260 = vmatpush1.bf16.msra.mxu0 0
      %1261 = vmatprep.subr.bf16.mxu0 0
      %1262 = vmatpush1.bf16.msra.mxu0 0
      %1263 = vmatprep.subr.bf16.mxu0 0
      %1264 = vmatpush1.bf16.msra.mxu0 0
      %1265 = vmatprep.subr.bf16.mxu0 0
      %1266 = vmatpush1.bf16.msra.mxu0 0
      %1267 = vmatprep.subr.bf16.mxu0 0
      %1268 = vmatpush1.bf16.msra.mxu0 0
      %1269 = vmatprep.subr.bf16.mxu0 0
      %1270 = vmatpush1.bf16.msra.mxu0 0
      %1271 = vmatprep.mubr.bf16.mxu0 0
      %1272 = vmatmul.mubr.bf16.gmra.mrb[0].mxu0 %v1184
      %v1273 = vpop.f32.mrb[0].mxu0
      %v1274 = vadd.f32 0.0, %v1273
      %v1275 = vpop.f32.mrb[0].mxu0
      %v1276 = vpop.f32.mrb[0].mxu0
      %v1277 = vpop.f32.mrb[0].mxu0
      %1278 = vdwg.mxu0
      %v1279 = vsub.f32 0.0, %v1233
      %v1280 = vsub.f32 0.0, %v1235
      %v1281 = vsub.f32 0.0, %v1274
      %v1282 = vmul.f32 %v1279, 1.442695
      %v1283 = vpow.pop %v1282
      %v1284 = vmul.f32 %v1280, 1.442695
      %v1285 = vpow.pop %v1284
      %v1286 = vmul.f32 %v1281, 1.442695
      %v1287 = vpow.pop %v1286
      %v1288 = vadd.f32 %v1283, 1.0
      %v1289 = vadd.f32 %v1285, 1.0
      %v1290 = vadd.f32 %v1287, 1.0
      %v1291 = vrcp.pop %v1288
      %v1292 = vmul.f32 1.0, %v1291
      %v1293 = vrcp.pop %v1289
      %v1294 = vmul.f32 1.0, %v1293
      %v1295 = vrcp.pop %v1290
      %v1296 = vmul.f32 1.0, %v1295
      %v1300 = vrot.slane %v1292, 1
      %v1301 = vrot.slane %v1294, 1
      %v1302 = vrot.slane %v1296, 1
      %v1306 = vmul.f32 %v1233, %v1300
      %v1307 = vmul.f32 %v1235, %v1301
      %v1308 = vmul.f32 %v1274, %v1302
      %v1312 = vcombine.low %v1306, %v1307
      %v1314 = vunpack.c.l.s4 1966171168
      %v1315 = vunpack.c.0.s8 %v1314
      %v1316 = vlaneseq
      %v1317 = vshrl.u32 %v1316, 7
      %v1318 = vsub.s32 %v1315, %v1317
      %v1319 = vrot.slane %v1312, %v1318
      %v1321 = vunpack.c.l.s4 1966171168
      %v1322 = vunpack.c.0.s8 %v1321
      %v1323 = vlaneseq
      %v1324 = vshrl.u32 %v1323, 7
      %v1325 = vsub.s32 %v1322, %v1324
      %v1326 = vrot.slane %v1308, %v1325
      %v1327 = vcombine.low %v1319, %v1326
      %v1329 = vunpack.c.l.s4 1966171168
      %v1330 = vunpack.c.0.s8 %v1329
      %v1331 = vlaneseq
      %v1332 = vshrl.u32 %v1331, 7
      %v1333 = vsub.s32 %v1330, %v1332
      %v1334 = vrot.slane %v1327, %v1333
      %v1336 = vlaneseq
      %vm1337 = vcmp.ge.s32.totalorder %v1336, 0
      %vm1338 = vcmp.lt.s32.totalorder %v1336, 384
      %vm1339 = vmand %vm1337, %vm1338
      %1340 = vst.msk [vmem:[%s222] sm:$0x7] %vm1339, %v1334
      %p1341 = scmp.lt.s32.totalorder %s16, 1
      %s1342 = scalar_select %p1341, %s16, 1
      %s1343 = smul.addr %s1342, 3
      %s1344 = scalar_lea.vmem %s5, %s1343
      // Predicated region
      $region41: #{carrier_decoder_forward.1} parent=39 // pred_check
        %p1345 = pneg %p144
      $region42: #{carrier_decoder_forward.1} parent=39 // pred_check_branch
        %1347 = sbr.rel (%p1345) target = $region44
      $region43: #{carrier_decoder_forward.1} parent=39 // pred_region
        _
      $region44: #{carrier_decoder_forward.1} parent=39 // pred_fallthru
        _
    $region40: #{carrier_decoder_forward.1} parent=5 // pred_fallthru
      _
    %p1348 = scmp.le.s32.totalorder 2, %s11
    // Predicated region
    $region45: #{carrier_decoder_forward.1} parent=5 // pred_check
      %p1349 = pneg %p1348
    $region46: #{carrier_decoder_forward.1} parent=5 // pred_check_branch
      %1351 = sbr.rel (%p1349) target = $region48
    $region47: #{carrier_decoder_forward.1} parent=5 // pred_region
      %s1352 = ssub.s32 %s11, 2
      // Predicated region
      $region49: #{carrier_decoder_forward.1} parent=47 // pred_check
        %p1353 = pneg %p150
      $region50: #{carrier_decoder_forward.1} parent=47 // pred_check_branch
        %1355 = sbr.rel (%p1353) target = $region52
      $region51: #{carrier_decoder_forward.1} parent=47 // pred_region
        %p1356 = scmp.lt.s32.totalorder %s17, 1
        %s1357 = scalar_select %p1356, %s17, 1
        %s1358 = smul.addr %s1357, 3
        %s1359 = scalar_lea.vmem %s5, %s1358
      $region52: #{carrier_decoder_forward.1} parent=47 // pred_fallthru
        _
    $region48: #{carrier_decoder_forward.1} parent=5 // pred_fallthru
      _
  $region6: #{carrier_decoder_forward.1} parent=0 // loop_footer
    %s15 = sadd.s32 1, %s11
  $region7: #{carrier_decoder_forward.1} parent=0 // loop_footer_branch
    %10 = sbr.rel target = $region3
  $region8: #{carrier_decoder_forward.1} parent=0 // loop_exit
    _

</llo_original>
